<compile_context>
chip_gen: v7x
topology: tpu7x:2x2x1
jax: 0.10.0
libtpu: 0.0.40
codegen_flags: <defaults>
</compile_context>

<pallas_src>
import jax
import jax.numpy as jnp
from jax.experimental import pallas as pl
from jax.experimental.pallas import tpu as pltpu


def _round_up(x, m):
    return ((x + m - 1) // m) * m


def mlp_kernel(x_ref, w1_ref, w2_ref, o_ref, h_ref):
    """Fused 2-layer 1x1x1-conv MLP on one (channels, spatial-tile) block.

    x_ref : (Cin,  ts)   activations (native dtype), channels on sublanes
    w1_ref: (Chid, Cin)  layer-1 weight, PyTorch (out, in) layout, resident
    w2_ref: (Cout, Chid) layer-2 weight, resident
    o_ref : (Cout, ts)   output tile (lane-dense stores)
    h_ref : (Chid, ts)   VMEM scratch for hidden activations (compute dtype)
    """
    # In-kernel cast to the compute dtype (hidden under the DMA of the next tile).
    x = x_ref[...].astype(w1_ref.dtype)
    a1 = jnp.dot(w1_ref[...], x, preferred_element_type=jnp.float32)
    # ReLU on the f32 accumulator; downcast only when staging to scratch.
    h_ref[...] = jnp.maximum(a1, 0.0).astype(h_ref.dtype)
    a2 = jnp.dot(w2_ref[...], h_ref[...], preferred_element_type=jnp.float32)
    o_ref[...] = jnp.maximum(a2, 0.0).astype(o_ref.dtype)


def mlp_forward(x, w1, w2, *, spatial_tile=None, compute_dtype=jnp.bfloat16,
                out_dtype=None):
    """Forward pass of the `mlp` backbone.

    x : (N, Cin, D, H, W)  NCDHW, like the PyTorch Conv3d input.
    w1: (Chid, Cin)        Conv3d weight (out, in, 1, 1, 1) squeezed.
    w2: (Cout, Chid)
    Returns (N, Cout, D, H, W) in `out_dtype` (default: x.dtype).
    """
    N, Cin, D, H, W = x.shape
    Chid = w1.shape[0]
    Cout = w2.shape[0]
    S = D * H * W

    cdt = jnp.dtype(compute_dtype)
    odt = jnp.dtype(out_dtype) if out_dtype is not None else jnp.dtype(x.dtype)
    xdt = jnp.dtype(x.dtype)

    # NCDHW -> (N, Cin, S): pure metadata reshape -- no transpose, no cast pass.
    x3 = x.reshape(N, Cin, S)
    w1c = w1.astype(cdt)   # weights are small; pre-cast once
    w2c = w2.astype(cdt)

    # ---- lane-tile selection under a generation-aware VMEM budget -----------
    if spatial_tile is None:
        spatial_tile = 2048 if cdt.itemsize <= 2 else 1024
    ts = max(128, _round_up(spatial_tile, 128))
    ts = min(ts, _round_up(S, 128))

    try:
        vmem_cap = int(pltpu.get_tpu_info().vmem_capacity_bytes)
    except Exception:
        vmem_cap = 64 * 1024 * 1024   # conservative (v7x per-core) fallback

    def _vmem_usage(t):
        return (2 * Cin * t * xdt.itemsize            # input tile, double-buffered
                + 2 * Cout * t * odt.itemsize         # output tile, double-buffered
                + Chid * t * cdt.itemsize             # hidden scratch
                + (Cin * Chid + Chid * Cout) * cdt.itemsize)  # resident weights

    budget = int(vmem_cap * 0.45)                     # headroom for compiler/internals
    while ts > 128 and _vmem_usage(ts) > budget:
        ts = _round_up(ts // 2, 128)
    # Keep a few grid steps in flight so the DMA pipeline overlaps and both
    # v7x TensorCores get work even at small N.
    while ts > 512 and N * pl.cdiv(S, ts) < 4:
        ts = _round_up(ts // 2, 128)

    vmem_limit = int(min(vmem_cap * 0.9,
                         max(32 * 1024 * 1024, _vmem_usage(ts) + (8 << 20))))

    grid = (N, pl.cdiv(S, ts))

    cost = pl.CostEstimate(
        flops=2 * N * S * (Cin * Chid + Chid * Cout),
        transcendentals=0,
        bytes_accessed=(N * S * (Cin * xdt.itemsize + Cout * odt.itemsize)
                        + (Cin * Chid + Chid * Cout) * cdt.itemsize),
    )

    def _run(buffered_weights):
        wkw = dict(pipeline_mode=pl.Buffered(1)) if buffered_weights else {}
        return pl.pallas_call(
            mlp_kernel,
            out_shape=jax.ShapeDtypeStruct((N, Cout, S), odt),
            grid_spec=pltpu.PrefetchScalarGridSpec(
                num_scalar_prefetch=0,
                grid=grid,
                in_specs=[
                    # Activation tile (batch dim squeezed out of the kernel view).
                    pl.BlockSpec((None, Cin, ts), lambda n, j: (n, 0, j)),
                    # Resident weights: constant index_map -> fetched once;
                    # single-buffered so the unused 2nd pipeline buffer is freed.
                    pl.BlockSpec((Chid, Cin), lambda n, j: (0, 0), **wkw),
                    pl.BlockSpec((Cout, Chid), lambda n, j: (0, 0), **wkw),
                ],
                out_specs=pl.BlockSpec((None, Cout, ts), lambda n, j: (n, 0, j)),
                scratch_shapes=[pltpu.VMEM((Chid, ts), cdt)],
            ),
            compiler_params=pltpu.CompilerParams(
                dimension_semantics=("parallel", "parallel"),
                vmem_limit_bytes=vmem_limit),
            cost_estimate=cost,
        )(x3, w1c, w2c)

    try:
        out = _run(True)
    except Exception:
        # Some Pallas versions reject pipeline_mode on a BlockSpec; fall back.
        out = _run(False)

    # (N, Cout, S) -> NCDHW: free reshape, no transpose, no slice, no pad.
    return out.reshape(N, Cout, D, H, W)


def _kaiming_normal(key, out_dim, in_dim, dtype=jnp.float32):
    # kaiming_init for a 1x1x1 Conv3d: fan_in = in_dim (kernel volume is 1).
    std = jnp.sqrt(2.0 / in_dim)
    return (std * jax.random.normal(key, (out_dim, in_dim))).astype(dtype)


def _reference(x, w1, w2):
    hp = jax.lax.Precision.HIGHEST
    h = jnp.maximum(jnp.einsum("ncdhw,oc->nodhw", x, w1, precision=hp), 0.0)
    return jnp.maximum(jnp.einsum("ncdhw,oc->nodhw", h, w2, precision=hp), 0.0)


if __name__ == "__main__":
    key = jax.random.PRNGKey(0)
    kx, k1, k2, kx2, k3, k4 = jax.random.split(key, 6)

    # --- test 1: tile-aligned shapes, f32 compute path -----------------------
    N, Cin, Chid, Cout = 2, 128, 128, 128
    D, H, W = 8, 8, 8                               # S = 512
    x = jax.random.normal(kx, (N, Cin, D, H, W), dtype=jnp.float32)
    w1 = _kaiming_normal(k1, Chid, Cin)
    w2 = _kaiming_normal(k2, Cout, Chid)
    y_ref = _reference(x, w1, w2)

    y = jax.block_until_ready(
        mlp_forward(x, w1, w2, spatial_tile=256, compute_dtype=jnp.float32))
    assert y.shape == (N, Cout, D, H, W)
    assert jnp.allclose(y, y_ref, atol=2e-3, rtol=2e-3)

    # --- test 2: ragged spatial extent (masked partial block) + odd channels -
    N2, Ci2, Ch2, Co2 = 1, 64, 48, 80
    D2, H2, W2 = 3, 5, 7                            # S = 105 -> one partial block
    x2 = jax.random.normal(kx2, (N2, Ci2, D2, H2, W2), dtype=jnp.float32)
    v1 = _kaiming_normal(k3, Ch2, Ci2)
    v2 = _kaiming_normal(k4, Co2, Ch2)
    y2 = jax.block_until_ready(
        mlp_forward(x2, v1, v2, compute_dtype=jnp.float32))
    assert y2.shape == (N2, Co2, D2, H2, W2)
    assert jnp.allclose(y2, _reference(x2, v1, v2), atol=2e-3, rtol=2e-3)

    # --- test 3: default bf16-operand path (f32 accumulation, f32 output) ----
    yb = jax.block_until_ready(mlp_forward(x, w1, w2))
    assert yb.shape == (N, Cout, D, H, W)
    assert yb.dtype == x.dtype
    rel = (jnp.max(jnp.abs(yb.astype(jnp.float32) - y_ref))
           / (jnp.max(jnp.abs(y_ref)) + 1e-6))
    assert float(rel) < 0.05, float(rel)

    print("KERNEL_OK")
</pallas_src>

<mosaic_0001>
module attributes {stable_mosaic.version = 11 : i64} {
  func.func @mlp_kernel(%arg0: i32, %arg1: i32, %arg2: memref<1x128x256xf32, #tpu.memory_space<vmem>>, %arg3: memref<128x128xf32, #tpu.memory_space<vmem>>, %arg4: memref<128x128xf32, #tpu.memory_space<vmem>>, %arg5: memref<1x128x256xf32, #tpu.memory_space<vmem>>, %arg6: memref<128x256xf32, #tpu.memory_space<vmem>>) attributes {dimension_semantics = [#tpu.dimension_semantics<parallel>, #tpu.dimension_semantics<parallel>], iteration_bounds = array<i64: 2, 2>, scalar_prefetch = 0 : i64, scratch_operands = 1 : i64, tpu.core_type = #tpu.core_type<tc>, window_params = [{transform_indices = @transform_0, window_bounds = array<i64: 1, 128, 256>}, {pipeline_mode = #tpu.pipeline_mode<synchronous>, transform_indices = @transform_1, window_bounds = array<i64: 128, 128>}, {pipeline_mode = #tpu.pipeline_mode<synchronous>, transform_indices = @transform_2, window_bounds = array<i64: 128, 128>}, {transform_indices = @transform_3, window_bounds = array<i64: 1, 128, 256>}]} {
    %c0 = arith.constant 0 : index
    %c0_0 = arith.constant 0 : index
    %c0_1 = arith.constant 0 : index
    %0 = vector.load %arg2[%c0, %c0_0, %c0_1] : memref<1x128x256xf32, #tpu.memory_space<vmem>>, vector<1x128x256xf32>
    %1 = vector.shape_cast %0 : vector<1x128x256xf32> to vector<128x256xf32>
    %c0_2 = arith.constant 0 : index
    %c0_3 = arith.constant 0 : index
    %2 = vector.load %arg3[%c0_2, %c0_3] : memref<128x128xf32, #tpu.memory_space<vmem>>, vector<128x128xf32>
    %cst = arith.constant dense<0.000000e+00> : vector<128x256xf32>
    %3 = tpu.matmul %2, %1, %cst {dimension_numbers = #tpu.dot_dimension_numbers<[1], [0], [0], [1], [0, 0, 1, 1], [], []>} : vector<128x128xf32>, vector<128x256xf32>, vector<128x256xf32> -> vector<128x256xf32>
    %cst_4 = arith.constant 0.000000e+00 : f32
    %4 = vector.broadcast %cst_4 : f32 to vector<128x256xf32>
    %5 = arith.maximumf %3, %4 : vector<128x256xf32>
    %c0_5 = arith.constant 0 : index
    %c0_6 = arith.constant 0 : index
    %6 = vector.load %arg6[%c0_5, %c0_6] : memref<128x256xf32, #tpu.memory_space<vmem>>, vector<128x256xf32>
    tpu.vector_store %arg6[%c0_5, %c0_6], %5 {strides = array<i32>} : memref<128x256xf32, #tpu.memory_space<vmem>>, vector<128x256xf32>,
    %c0_7 = arith.constant 0 : index
    %c0_8 = arith.constant 0 : index
    %7 = vector.load %arg4[%c0_7, %c0_8] : memref<128x128xf32, #tpu.memory_space<vmem>>, vector<128x128xf32>
    %c0_9 = arith.constant 0 : index
    %c0_10 = arith.constant 0 : index
    %8 = vector.load %arg6[%c0_9, %c0_10] : memref<128x256xf32, #tpu.memory_space<vmem>>, vector<128x256xf32>
    %cst_11 = arith.constant dense<0.000000e+00> : vector<128x256xf32>
    %9 = tpu.matmul %7, %8, %cst_11 {dimension_numbers = #tpu.dot_dimension_numbers<[1], [0], [0], [1], [0, 0, 1, 1], [], []>} : vector<128x128xf32>, vector<128x256xf32>, vector<128x256xf32> -> vector<128x256xf32>
    %cst_12 = arith.constant 0.000000e+00 : f32
    %10 = vector.broadcast %cst_12 : f32 to vector<128x256xf32>
    %11 = arith.maximumf %9, %10 : vector<128x256xf32>
    %c0_13 = arith.constant 0 : index
    %c0_14 = arith.constant 0 : index
    %c0_15 = arith.constant 0 : index
    %12 = vector.load %arg5[%c0_13, %c0_14, %c0_15] : memref<1x128x256xf32, #tpu.memory_space<vmem>>, vector<1x128x256xf32>
    %13 = vector.shape_cast %12 : vector<1x128x256xf32> to vector<128x256xf32>
    %14 = vector.shape_cast %11 : vector<128x256xf32> to vector<1x128x256xf32>
    tpu.vector_store %arg5[%c0_13, %c0_14, %c0_15], %14 {strides = array<i32>} : memref<1x128x256xf32, #tpu.memory_space<vmem>>, vector<1x128x256xf32>,
    return
  }
  func.func @transform_0(%arg0: i32, %arg1: i32) -> (i32, i32, i32) {
    %c0_i32 = arith.constant 0 : i32
    %c0_i32_0 = arith.constant 0 : i32
    return %arg0, %c0_i32, %arg1 : i32, i32, i32
  }
  func.func @transform_1(%arg0: i32, %arg1: i32) -> (i32, i32) {
    %c0_i32 = arith.constant 0 : i32
    %c0_i32_0 = arith.constant 0 : i32
    %c0_i32_1 = arith.constant 0 : i32
    return %c0_i32, %c0_i32_0 : i32, i32
  }
  func.func @transform_2(%arg0: i32, %arg1: i32) -> (i32, i32) {
    %c0_i32 = arith.constant 0 : i32
    %c0_i32_0 = arith.constant 0 : i32
    %c0_i32_1 = arith.constant 0 : i32
    return %c0_i32, %c0_i32_0 : i32, i32
  }
  func.func @transform_3(%arg0: i32, %arg1: i32) -> (i32, i32, i32) {
    %c0_i32 = arith.constant 0 : i32
    %c0_i32_0 = arith.constant 0 : i32
    return %arg0, %c0_i32, %arg1 : i32, i32, i32
  }
}

module attributes {stable_mosaic.version = 11 : i64} {
  func.func @mlp_kernel(%arg0: i32, %arg1: i32, %arg2: memref<1x128x256xf32, #tpu.memory_space<vmem>>, %arg3: memref<128x128xf32, #tpu.memory_space<vmem>>, %arg4: memref<128x128xf32, #tpu.memory_space<vmem>>, %arg5: memref<1x128x256xf32, #tpu.memory_space<vmem>>, %arg6: memref<128x256xf32, #tpu.memory_space<vmem>>) attributes {dimension_semantics = [#tpu.dimension_semantics<parallel>, #tpu.dimension_semantics<parallel>], iteration_bounds = array<i64: 2, 2>, scalar_prefetch = 0 : i64, scratch_operands = 1 : i64, tpu.core_type = #tpu.core_type<tc>, window_params = [{transform_indices = @transform_0, window_bounds = array<i64: 1, 128, 256>}, {pipeline_mode = #tpu.pipeline_mode<synchronous>, transform_indices = @transform_1, window_bounds = array<i64: 128, 128>}, {pipeline_mode = #tpu.pipeline_mode<synchronous>, transform_indices = @transform_2, window_bounds = array<i64: 128, 128>}, {transform_indices = @transform_3, window_bounds = array<i64: 1, 128, 256>}]} {
    %c0 = arith.constant 0 : index
    %c0_0 = arith.constant 0 : index
    %c0_1 = arith.constant 0 : index
    %0 = vector.load %arg2[%c0, %c0_0, %c0_1] : memref<1x128x256xf32, #tpu.memory_space<vmem>>, vector<1x128x256xf32>
    %1 = vector.shape_cast %0 : vector<1x128x256xf32> to vector<128x256xf32>
    %c0_2 = arith.constant 0 : index
    %c0_3 = arith.constant 0 : index
    %2 = vector.load %arg3[%c0_2, %c0_3] : memref<128x128xf32, #tpu.memory_space<vmem>>, vector<128x128xf32>
    %cst = arith.constant dense<0.000000e+00> : vector<128x256xf32>
    %3 = tpu.matmul %2, %1, %cst {dimension_numbers = #tpu.dot_dimension_numbers<[1], [0], [0], [1], [0, 0, 1, 1], [], []>} : vector<128x128xf32>, vector<128x256xf32>, vector<128x256xf32> -> vector<128x256xf32>
    %cst_4 = arith.constant 0.000000e+00 : f32
    %4 = vector.broadcast %cst_4 : f32 to vector<128x256xf32>
    %5 = arith.maximumf %3, %4 : vector<128x256xf32>
    %c0_5 = arith.constant 0 : index
    %c0_6 = arith.constant 0 : index
    %6 = vector.load %arg6[%c0_5, %c0_6] : memref<128x256xf32, #tpu.memory_space<vmem>>, vector<128x256xf32>
    tpu.vector_store %arg6[%c0_5, %c0_6], %5 {strides = array<i32>} : memref<128x256xf32, #tpu.memory_space<vmem>>, vector<128x256xf32>,
    %c0_7 = arith.constant 0 : index
    %c0_8 = arith.constant 0 : index
    %7 = vector.load %arg4[%c0_7, %c0_8] : memref<128x128xf32, #tpu.memory_space<vmem>>, vector<128x128xf32>
    %c0_9 = arith.constant 0 : index
    %c0_10 = arith.constant 0 : index
    %8 = vector.load %arg6[%c0_9, %c0_10] : memref<128x256xf32, #tpu.memory_space<vmem>>, vector<128x256xf32>
    %cst_11 = arith.constant dense<0.000000e+00> : vector<128x256xf32>
    %9 = tpu.matmul %7, %8, %cst_11 {dimension_numbers = #tpu.dot_dimension_numbers<[1], [0], [0], [1], [0, 0, 1, 1], [], []>} : vector<128x128xf32>, vector<128x256xf32>, vector<128x256xf32> -> vector<128x256xf32>
    %cst_12 = arith.constant 0.000000e+00 : f32
    %10 = vector.broadcast %cst_12 : f32 to vector<128x256xf32>
    %11 = arith.maximumf %9, %10 : vector<128x256xf32>
    %c0_13 = arith.constant 0 : index
    %c0_14 = arith.constant 0 : index
    %c0_15 = arith.constant 0 : index
    %12 = vector.load %arg5[%c0_13, %c0_14, %c0_15] : memref<1x128x256xf32, #tpu.memory_space<vmem>>, vector<1x128x256xf32>
    %13 = vector.shape_cast %12 : vector<1x128x256xf32> to vector<128x256xf32>
    %14 = vector.shape_cast %11 : vector<128x256xf32> to vector<1x128x256xf32>
    tpu.vector_store %arg5[%c0_13, %c0_14, %c0_15], %14 {strides = array<i32>} : memref<1x128x256xf32, #tpu.memory_space<vmem>>, vector<1x128x256xf32>,
    return
  }
  func.func @transform_0(%arg0: i32, %arg1: i32) -> (i32, i32, i32) {
    %c0_i32 = arith.constant 0 : i32
    %c0_i32_0 = arith.constant 0 : i32
    return %arg0, %c0_i32, %arg1 : i32, i32, i32
  }
  func.func @transform_1(%arg0: i32, %arg1: i32) -> (i32, i32) {
    %c0_i32 = arith.constant 0 : i32
    %c0_i32_0 = arith.constant 0 : i32
    %c0_i32_1 = arith.constant 0 : i32
    return %c0_i32, %c0_i32_0 : i32, i32
  }
  func.func @transform_2(%arg0: i32, %arg1: i32) -> (i32, i32) {
    %c0_i32 = arith.constant 0 : i32
    %c0_i32_0 = arith.constant 0 : i32
    %c0_i32_1 = arith.constant 0 : i32
    return %c0_i32, %c0_i32_0 : i32, i32
  }
  func.func @transform_3(%arg0: i32, %arg1: i32) -> (i32, i32, i32) {
    %c0_i32 = arith.constant 0 : i32
    %c0_i32_0 = arith.constant 0 : i32
    return %arg0, %c0_i32, %arg1 : i32, i32, i32
  }
}

</mosaic_0001>

<llo_original>
// kernel: tpu_custom_call.1
$region0: #{tpu_custom_call.1}
  #allocation0 [shape = 'u32[]', space=smem, size = 0x4, offset = 0x4, fixed_abs, tag = 'smem constant byte address 0x4 - core index']
  #allocation1 [shape = 'u32[144,128]{1,0:T(1,128)}', space=vmem, size = 0x12000, scoped, tag = 'internal scratch']
  #allocation2 [shape = 'f32[128,256]{1,0:T(8,128)}', space=vmem, size = 0x20000, scoped, tag = 'scratch operand']
  %s0 = inlined_call_operand.hbm [shape: f32[2,128,512], index: 0, kind: input, shape index: {}]
  %s1 = inlined_call_operand.hbm [shape: f32[128,128], index: 1, kind: input, shape index: {}]
  %s2 = inlined_call_operand.hbm [shape: f32[128,128], index: 2, kind: input, shape index: {}]
  %s3 = inlined_call_operand.hbm [shape: f32[2,128,512], index: 3, kind: output, shape index: {}]
  %s4 = sld [smem:[#allocation0]]
  $region57: #{tpu_custom_call.1} parent=0
    _
  %s6 = ssub.s32 1, %s4
  %s7 = scalar_select 0, %s6, %s4
  $region1: #{tpu_custom_call.1} parent=0
    #allocation3 [shape = 'u8[262144]{0}', space=vmem, size = 0x40000, scoped, tag = 'input window, operand 0']
    #allocation4 [shape = 's32[2]{0}', space=sflag, size = 0x8, scoped, tag = 'scoped memory for tpu_custom_call.1']
    #allocation5 [shape = 's32[2]{0}', space=sflag, size = 0x8, scoped, tag = 'scoped memory for tpu_custom_call.1']
    #allocation6 [shape = 'u8[65536]{0}', space=vmem, size = 0x10000, scoped, tag = 'input window, operand 1, single buffered']
    #allocation7 [shape = 's32[1]{0}', space=sflag, size = 0x4, scoped, tag = 'scoped memory for tpu_custom_call.1']
    #allocation8 [shape = 'u8[65536]{0}', space=vmem, size = 0x10000, scoped, tag = 'input window, operand 2, single buffered']
    #allocation9 [shape = 'u8[262144]{0}', space=vmem, size = 0x40000, scoped, tag = 'output window, operand 0']
    %8 = vsyncpa [#allocation4], 0
    %s9 = scalar_lea.sflag [#allocation4], 1
    %10 = vsyncpa %s9, 0
    %11 = vsyncpa [#allocation7], 0
    %12 = vsyncpa [#allocation5], 0
    %s13 = scalar_lea.sflag [#allocation5], 1
    %14 = vsyncpa %s13, 0
    loop: start=0, step=1, limit=6
    $region2: #{tpu_custom_call.1} parent=1 // loop_pre_header
      _
    $region3: #{tpu_custom_call.1} parent=1 // loop_header
      %s16 = sphi 0, %s20
      %p17 = scmp.ge.s32.totalorder %s16, 6
      %s23 = sphi 0, %s35
      %s24 = sphi 0, %s31
      %s25 = sphi 0, %s23
      %s26 = sphi 0, %s24
      %s27 = sphi 0, %s25
      %s28 = sphi 0, %s26
      %s40 = sphi 0, %s42
      %s43 = sphi 0, %s40
      %s44 = sphi 0, %s43
      %s60 = sphi 0, %s44
      %s64 = sphi 0, %s64
      %s66 = sphi 0, %s64
      %s67 = sphi 0, %s66
      %s81 = sphi 0, %s67
      %s85 = sphi 0, %s85
      %s87 = sphi 0, %s85
      %s88 = sphi 0, %s87
      %s102 = sphi 0, %s88
      %s110 = sphi 0, %s112
      %s113 = sphi 0, %s110
      %s114 = sphi 0, %s113
      %s130 = sphi 0, %s114
    $region4: #{tpu_custom_call.1} parent=1 // loop_header_branch
      %19 = sbr.rel (%p17) target = $region8
    $region5: #{tpu_custom_call.1} parent=1 // loop_body
      %s21 = ssub.s32 %s16, 1
      %s22 = ssub.s32 %s16, 2
      %s29 = sadd.s32 1, %s24
      %p30 = scmp.ge.s32.totalorder %s29, 2
      %s31 = scalar_select %p30, 0, %s29
      %s32 = sadd.s32 1, %s23
      %s33 = scalar_select %p30, %s32, %s23
      %p34 = scmp.ge.s32.totalorder %s33, 2
      %s35 = scalar_select %p34, 0, %s33
      %s36 = ssub.s32 %s23, %s35
      %s37 = ssub.s32 %s24, %s31
      %s38 = sor.u32 %s36, %s37
      %p39 = scmp.eq.s32.totalorder %s38, 0
      %s41 = sadd.s32 %s40, 1
      %s42 = scalar_select %p39, %s40, %s41
      %p45 = pneg %p39
      %p46 = scmp.eq.s32.totalorder %s16, 3
      %p47 = por %p45, %p46
      %p48 = scmp.ne.s32.totalorder %s40, %s43
      %p49 = scmp.eq.s32.totalorder %s16, 0
      %p50 = por %p48, %p49
      %p51 = scmp.ne.s32.totalorder %s40, %s43
      %p52 = scmp.eq.s32.totalorder %s21, 3
      %p53 = por %p51, %p52
      %p54 = scmp.ne.s32.totalorder %s43, %s44
      %p55 = scmp.eq.s32.totalorder %s21, 0
      %p56 = por %p54, %p55
      %p57 = scmp.ne.s32.totalorder %s43, %s44
      %p58 = scmp.eq.s32.totalorder %s22, 3
      %p59 = por %p57, %p58
      %p61 = scmp.ne.s32.totalorder %s44, %s60
      %p62 = scmp.eq.s32.totalorder %s22, 0
      %p63 = por %p61, %p62
      %s65 = sadd.s32 %s64, 1
      %p68 = scmp.eq.s32.totalorder %s16, 3
      %p69 = scmp.ne.s32.totalorder %s64, %s66
      %p70 = scmp.eq.s32.totalorder %s16, 0
      %p71 = por %p69, %p70
      %p72 = scmp.ne.s32.totalorder %s64, %s66
      %p73 = scmp.eq.s32.totalorder %s21, 3
      %p74 = por %p72, %p73
      %p75 = scmp.ne.s32.totalorder %s66, %s67
      %p76 = scmp.eq.s32.totalorder %s21, 0
      %p77 = por %p75, %p76
      %p78 = scmp.ne.s32.totalorder %s66, %s67
      %p79 = scmp.eq.s32.totalorder %s22, 3
      %p80 = por %p78, %p79
      %p82 = scmp.ne.s32.totalorder %s67, %s81
      %p83 = scmp.eq.s32.totalorder %s22, 0
      %p84 = por %p82, %p83
      %s86 = sadd.s32 %s85, 1
      %p89 = scmp.eq.s32.totalorder %s16, 3
      %p90 = scmp.ne.s32.totalorder %s85, %s87
      %p91 = scmp.eq.s32.totalorder %s16, 0
      %p92 = por %p90, %p91
      %p93 = scmp.ne.s32.totalorder %s85, %s87
      %p94 = scmp.eq.s32.totalorder %s21, 3
      %p95 = por %p93, %p94
      %p96 = scmp.ne.s32.totalorder %s87, %s88
      %p97 = scmp.eq.s32.totalorder %s21, 0
      %p98 = por %p96, %p97
      %p99 = scmp.ne.s32.totalorder %s87, %s88
      %p100 = scmp.eq.s32.totalorder %s22, 3
      %p101 = por %p99, %p100
      %p103 = scmp.ne.s32.totalorder %s88, %s102
      %p104 = scmp.eq.s32.totalorder %s22, 0
      %p105 = por %p103, %p104
      %s106 = ssub.s32 %s23, %s35
      %s107 = ssub.s32 %s24, %s31
      %s108 = sor.u32 %s106, %s107
      %p109 = scmp.eq.s32.totalorder %s108, 0
      %s111 = sadd.s32 %s110, 1
      %s112 = scalar_select %p109, %s110, %s111
      %p115 = pneg %p109
      %p116 = scmp.eq.s32.totalorder %s16, 3
      %p117 = por %p115, %p116
      %p118 = scmp.ne.s32.totalorder %s110, %s113
      %p119 = scmp.eq.s32.totalorder %s16, 0
      %p120 = por %p118, %p119
      %p121 = scmp.ne.s32.totalorder %s110, %s113
      %p122 = scmp.eq.s32.totalorder %s21, 3
      %p123 = por %p121, %p122
      %p124 = scmp.ne.s32.totalorder %s113, %s114
      %p125 = scmp.eq.s32.totalorder %s21, 0
      %p126 = por %p124, %p125
      %p127 = scmp.ne.s32.totalorder %s113, %s114
      %p128 = scmp.eq.s32.totalorder %s22, 3
      %p129 = por %p127, %p128
      %p131 = scmp.ne.s32.totalorder %s114, %s130
      %p132 = scmp.eq.s32.totalorder %s22, 0
      %p133 = por %p131, %p132
      %p134 = scmp.le.s32.totalorder 1, %s16
      %p135 = scmp.lt.s32.totalorder %s16, 5
      %p136 = pnand %p134, %p135
      %p137 = pneg %p136
      // Predicated region
      $region9: #{tpu_custom_call.1} parent=5 // pred_check
        _
      $region10: #{tpu_custom_call.1} parent=5 // pred_check_branch
        %139 = sbr.rel (%p136) target = $region12
      $region11: #{tpu_custom_call.1} parent=5 // pred_region
        %s140 = ssub.s32 %s16, 1
        // Predicated region
        $region13: #{tpu_custom_call.1} parent=11 // pred_check
          %p141 = pneg %p77
        $region14: #{tpu_custom_call.1} parent=11 // pred_check_branch
          %143 = sbr.rel (%p141) target = $region16
        $region15: #{tpu_custom_call.1} parent=11 // pred_region
          %s145 = ssub.s32 2048, 2048
          %146 = vsyncadd [#allocation7], %s145
          %s147 = sshll.u32 [#allocation6], 4
          %s148 = int_to_ptr.vmem [resolvable:$true] %s147
          %153 = dma.hbm_to_vmem [thread:$0]  %s1, 2048, %s148, [#allocation7], 128, 128, 8
        $region16: #{tpu_custom_call.1} parent=11 // pred_fallthru
          _
        // Predicated region
        $region17: #{tpu_custom_call.1} parent=11 // pred_check
          %p154 = pneg %p98
        $region18: #{tpu_custom_call.1} parent=11 // pred_check_branch
          %156 = sbr.rel (%p154) target = $region20
        $region19: #{tpu_custom_call.1} parent=11 // pred_region
          %s158 = ssub.s32 2048, 2048
          %159 = vsyncadd [#allocation7], %s158
          %s160 = sshll.u32 [#allocation8], 4
          %s161 = int_to_ptr.vmem [resolvable:$true] %s160
          %166 = dma.hbm_to_vmem [thread:$0]  %s2, 2048, %s161, [#allocation7], 128, 128, 8
        $region20: #{tpu_custom_call.1} parent=11 // pred_fallthru
          _
      $region12: #{tpu_custom_call.1} parent=5 // pred_fallthru
        _
      %p167 = scmp.lt.s32.totalorder %s16, 4
      // Predicated region
      $region21: #{tpu_custom_call.1} parent=5 // pred_check
        %p168 = pneg %p167
      $region22: #{tpu_custom_call.1} parent=5 // pred_check_branch
        %170 = sbr.rel (%p168) target = $region24
      $region23: #{tpu_custom_call.1} parent=5 // pred_region
        // Predicated region
        $region25: #{tpu_custom_call.1} parent=23 // pred_check
          %p171 = pneg %p50
        $region26: #{tpu_custom_call.1} parent=23 // pred_check_branch
          %173 = sbr.rel (%p171) target = $region28
        $region27: #{tpu_custom_call.1} parent=23 // pred_region
          %s174 = sand.u32 %s40, 1
          %s175 = scalar_lea.sflag [#allocation4], %s174
          %s176 = sand.u32 %s40, 1
          %s177 = smul.addr %s176, 256
          %s178 = scalar_lea.vmem [#allocation3], %s177
          %s179 = smul.u32 2, %s24
          %s181 = ssub.s32 4096, 4096
          %182 = vsyncadd %s175, %s181
          %s183 = smul.addr %s23, 64
          %s184 = sadd.s32 %s179, %s183
          %s185 = smul.addr %s184, 128
          %s186 = scalar_lea.hbm %s0, %s185
          %s187 = sshll.u32 %s178, 4
          %s188 = int_to_ptr.vmem [resolvable:$true] %s187
          %193 = dma.hbm_to_vmem [thread:$0]  %s186, 4096, %s188, %s175, 512, 256, 16
        $region28: #{tpu_custom_call.1} parent=23 // pred_fallthru
          _
      $region24: #{tpu_custom_call.1} parent=5 // pred_fallthru
        _
      %p194 = scmp.le.s32.totalorder 1, %s16
      %p195 = scmp.lt.s32.totalorder %s16, 5
      %p196 = pnand %p194, %p195
      %p197 = pneg %p196
      // Predicated region
      $region29: #{tpu_custom_call.1} parent=5 // pred_check
        _
      $region30: #{tpu_custom_call.1} parent=5 // pred_check_branch
        %199 = sbr.rel (%p196) target = $region32
      $region31: #{tpu_custom_call.1} parent=5 // pred_region
        %s200 = ssub.s32 %s16, 1
        %s201 = sand.u32 %s43, 1
        %s202 = scalar_lea.sflag [#allocation4], %s201
        %s203 = sand.u32 %s43, 1
        %s204 = smul.addr %s203, 256
        %s205 = scalar_lea.vmem [#allocation3], %s204
        // Predicated region
        $region33: #{tpu_custom_call.1} parent=31 // pred_check
          %p206 = pneg %p56
        $region34: #{tpu_custom_call.1} parent=31 // pred_check_branch
          %208 = sbr.rel (%p206) target = $region36
        $region35: #{tpu_custom_call.1} parent=31 // pred_region
          %209 = dma.done %s202, 4096
        $region36: #{tpu_custom_call.1} parent=31 // pred_fallthru
          _
        // Predicated region
        $region37: #{tpu_custom_call.1} parent=31 // pred_check
          %p210 = pneg %p77
        $region38: #{tpu_custom_call.1} parent=31 // pred_check_branch
          %212 = sbr.rel (%p210) target = $region40
        $region39: #{tpu_custom_call.1} parent=31 // pred_region
          %213 = dma.done [#allocation7], 2048
        $region40: #{tpu_custom_call.1} parent=31 // pred_fallthru
          _
        // Predicated region
        $region41: #{tpu_custom_call.1} parent=31 // pred_check
          %p214 = pneg %p98
        $region42: #{tpu_custom_call.1} parent=31 // pred_check_branch
          %216 = sbr.rel (%p214) target = $region44
        $region43: #{tpu_custom_call.1} parent=31 // pred_region
          %217 = dma.done [#allocation7], 2048
        $region44: #{tpu_custom_call.1} parent=31 // pred_fallthru
          _
        %s218 = sand.u32 %s43, 1
        %s219 = scalar_lea.sflag [#allocation4], %s218
        %s220 = sand.u32 %s43, 1
        %s221 = smul.addr %s220, 256
        %s222 = scalar_lea.vmem [#allocation3], %s221
        %p223 = pneg %p56
        %p224 = pneg %p53
        %p225 = pneg %p77
        %p226 = pneg %p74
        %p227 = pneg %p98
        %p228 = pneg %p95
        %p229 = pneg %p126
        %p230 = pneg %p123
        %s231 = sand.u32 %s113, 1
        %s232 = scalar_lea.sflag [#allocation5], %s231
        %s233 = sand.u32 %s113, 1
        %s234 = smul.addr %s233, 256
        %s235 = scalar_lea.vmem [#allocation9], %s234
        %s236 = smul.u32 2, %s26
        %s237 = smul.u32 2, %s26
        %v238 = vld [vmem:[%s205] sm:$0xff]
        %v239 = vld [vmem:[%s205 + $0x8] sm:$0xff]
        %v240 = vld [vmem:[%s205 + $0x10] sm:$0xff]
        %v241 = vld [vmem:[%s205 + $0x18] sm:$0xff]
        %v242 = vld [vmem:[%s205 + $0x20] sm:$0xff]
        %v243 = vld [vmem:[%s205 + $0x28] sm:$0xff]
        %v244 = vld [vmem:[%s205 + $0x30] sm:$0xff]
        %v245 = vld [vmem:[%s205 + $0x38] sm:$0xff]
        %v246 = vld [vmem:[%s205 + $0x40] sm:$0xff]
        %v247 = vld [vmem:[%s205 + $0x48] sm:$0xff]
        %v248 = vld [vmem:[%s205 + $0x50] sm:$0xff]
        %v249 = vld [vmem:[%s205 + $0x58] sm:$0xff]
        %v250 = vld [vmem:[%s205 + $0x60] sm:$0xff]
        %v251 = vld [vmem:[%s205 + $0x68] sm:$0xff]
        %v252 = vld [vmem:[%s205 + $0x70] sm:$0xff]
        %v253 = vld [vmem:[%s205 + $0x78] sm:$0xff]
        %v254 = vld [vmem:[%s205 + $0x80] sm:$0xff]
        %v255 = vld [vmem:[%s205 + $0x88] sm:$0xff]
        %v256 = vld [vmem:[%s205 + $0x90] sm:$0xff]
        %v257 = vld [vmem:[%s205 + $0x98] sm:$0xff]
        %v258 = vld [vmem:[%s205 + $0xa0] sm:$0xff]
        %v259 = vld [vmem:[%s205 + $0xa8] sm:$0xff]
        %v260 = vld [vmem:[%s205 + $0xb0] sm:$0xff]
        %v261 = vld [vmem:[%s205 + $0xb8] sm:$0xff]
        %v262 = vld [vmem:[%s205 + $0xc0] sm:$0xff]
        %v263 = vld [vmem:[%s205 + $0xc8] sm:$0xff]
        %v264 = vld [vmem:[%s205 + $0xd0] sm:$0xff]
        %v265 = vld [vmem:[%s205 + $0xd8] sm:$0xff]
        %v266 = vld [vmem:[%s205 + $0xe0] sm:$0xff]
        %v267 = vld [vmem:[%s205 + $0xe8] sm:$0xff]
        %v268 = vld [vmem:[%s205 + $0xf0] sm:$0xff]
        %v269 = vld [vmem:[%s205 + $0xf8] sm:$0xff]
        %v270 = vld [vmem:[#allocation6] sm:$0xff]
        %v271 = vld [vmem:[#allocation6 + $0x8] sm:$0xff]
        %v272 = vld [vmem:[#allocation6 + $0x10] sm:$0xff]
        %v273 = vld [vmem:[#allocation6 + $0x18] sm:$0xff]
        %v274 = vld [vmem:[#allocation6 + $0x20] sm:$0xff]
        %v275 = vld [vmem:[#allocation6 + $0x28] sm:$0xff]
        %v276 = vld [vmem:[#allocation6 + $0x30] sm:$0xff]
        %v277 = vld [vmem:[#allocation6 + $0x38] sm:$0xff]
        %v278 = vld [vmem:[#allocation6 + $0x40] sm:$0xff]
        %v279 = vld [vmem:[#allocation6 + $0x48] sm:$0xff]
        %v280 = vld [vmem:[#allocation6 + $0x50] sm:$0xff]
        %v281 = vld [vmem:[#allocation6 + $0x58] sm:$0xff]
        %v282 = vld [vmem:[#allocation6 + $0x60] sm:$0xff]
        %v283 = vld [vmem:[#allocation6 + $0x68] sm:$0xff]
        %v284 = vld [vmem:[#allocation6 + $0x70] sm:$0xff]
        %v285 = vld [vmem:[#allocation6 + $0x78] sm:$0xff]
        %286 = vmatprep.subr.mxu0 %v239
        %287 = vmatpush1.msra.mxu0 %v238
        %288 = vmatprep.subr.mxu0 %v241
        %289 = vmatpush1.msra.mxu0 %v240
        %290 = vmatprep.subr.mxu0 %v243
        %291 = vmatpush1.msra.mxu0 %v242
        %292 = vmatprep.subr.mxu0 %v245
        %293 = vmatpush1.msra.mxu0 %v244
        %294 = vmatprep.subr.mxu0 %v247
        %295 = vmatpush1.msra.mxu0 %v246
        %296 = vmatprep.subr.mxu0 %v249
        %297 = vmatpush1.msra.mxu0 %v248
        %298 = vmatprep.subr.mxu0 %v251
        %299 = vmatpush1.msra.mxu0 %v250
        %300 = vmatprep.subr.mxu0 %v253
        %301 = vmatpush1.msra.mxu0 %v252
        %302 = vmatprep.subr.mxu0 %v255
        %303 = vmatpush1.msra.mxu0 %v254
        %304 = vmatprep.subr.mxu0 %v257
        %305 = vmatpush1.msra.mxu0 %v256
        %306 = vmatprep.subr.mxu0 %v259
        %307 = vmatpush1.msra.mxu0 %v258
        %308 = vmatprep.subr.mxu0 %v261
        %309 = vmatpush1.msra.mxu0 %v260
        %310 = vmatprep.subr.mxu0 %v263
        %311 = vmatpush1.msra.mxu0 %v262
        %312 = vmatprep.subr.mxu0 %v265
        %313 = vmatpush1.msra.mxu0 %v264
        %314 = vmatprep.subr.mxu0 %v267
        %315 = vmatpush1.msra.mxu0 %v266
        %316 = vmatprep.subr.mxu0 %v269
        %317 = vmatpush1.msra.mxu0 %v268
        %318 = vmatprep.subr.mxu0 0.0
        %319 = vmatpush1.msra.mxu0 0.0
        %320 = vmatprep.subr.mxu0 0.0
        %321 = vmatpush1.msra.mxu0 0.0
        %322 = vmatprep.subr.mxu0 0.0
        %323 = vmatpush1.msra.mxu0 0.0
        %324 = vmatprep.subr.mxu0 0.0
        %325 = vmatpush1.msra.mxu0 0.0
        %326 = vmatprep.subr.mxu0 0.0
        %327 = vmatpush1.msra.mxu0 0.0
        %328 = vmatprep.subr.mxu0 0.0
        %329 = vmatpush1.msra.mxu0 0.0
        %330 = vmatprep.subr.mxu0 0.0
        %331 = vmatpush1.msra.mxu0 0.0
        %332 = vmatprep.subr.mxu0 0.0
        %333 = vmatpush1.msra.mxu0 0.0
        %334 = vmatprep.subr.mxu0 0.0
        %335 = vmatpush1.msra.mxu0 0.0
        %336 = vmatprep.subr.mxu0 0.0
        %337 = vmatpush1.msra.mxu0 0.0
        %338 = vmatprep.subr.mxu0 0.0
        %339 = vmatpush1.msra.mxu0 0.0
        %340 = vmatprep.subr.mxu0 0.0
        %341 = vmatpush1.msra.mxu0 0.0
        %342 = vmatprep.subr.mxu0 0.0
        %343 = vmatpush1.msra.mxu0 0.0
        %344 = vmatprep.subr.mxu0 0.0
        %345 = vmatpush1.msra.mxu0 0.0
        %346 = vmatprep.subr.mxu0 0.0
        %347 = vmatpush1.msra.mxu0 0.0
        %348 = vmatprep.subr.mxu0 0.0
        %349 = vmatpush1.msra.mxu0 0.0
        %350 = vmatprep.mubr.f32.mxu0 0.0
        %351 = vmatmul.mubr.f32.gmra.mrb[0].mxu0 %v270
        %v352 = vpop.f32.mrb[0].mxu0
        %v353 = vadd.f32 0.0, %v352
        %v354 = vpop.f32.mrb[0].mxu0
        %v355 = vadd.f32 0.0, %v354
        %356 = vmatprep.mubr.f32.mxu0 0.0
        %357 = vmatmul.mubr.f32.gmra.mrb[0].mxu0 %v271
        %v358 = vpop.f32.mrb[0].mxu0
        %v359 = vadd.f32 0.0, %v358
        %v360 = vpop.f32.mrb[0].mxu0
        %v361 = vadd.f32 0.0, %v360
        %362 = vmatprep.mubr.f32.mxu0 0.0
        %363 = vmatmul.mubr.f32.gmra.mrb[0].mxu0 %v272
        %v364 = vpop.f32.mrb[0].mxu0
        %v365 = vadd.f32 0.0, %v364
        %v366 = vpop.f32.mrb[0].mxu0
        %v367 = vadd.f32 0.0, %v366
        %368 = vmatprep.mubr.f32.mxu0 0.0
        %369 = vmatmul.mubr.f32.gmra.mrb[0].mxu0 %v273
        %v370 = vpop.f32.mrb[0].mxu0
        %v371 = vadd.f32 0.0, %v370
        %v372 = vpop.f32.mrb[0].mxu0
        %v373 = vadd.f32 0.0, %v372
        %374 = vmatprep.mubr.f32.mxu0 0.0
        %375 = vmatmul.mubr.f32.gmra.mrb[0].mxu0 %v274
        %v376 = vpop.f32.mrb[0].mxu0
        %v377 = vadd.f32 0.0, %v376
        %v378 = vpop.f32.mrb[0].mxu0
        %v379 = vadd.f32 0.0, %v378
        %380 = vmatprep.mubr.f32.mxu0 0.0
        %381 = vmatmul.mubr.f32.gmra.mrb[0].mxu0 %v275
        %v382 = vpop.f32.mrb[0].mxu0
        %v383 = vadd.f32 0.0, %v382
        %v384 = vpop.f32.mrb[0].mxu0
        %v385 = vadd.f32 0.0, %v384
        %386 = vmatprep.mubr.f32.mxu0 0.0
        %387 = vmatmul.mubr.f32.gmra.mrb[0].mxu0 %v276
        %v388 = vpop.f32.mrb[0].mxu0
        %v389 = vadd.f32 0.0, %v388
        %v390 = vpop.f32.mrb[0].mxu0
        %v391 = vadd.f32 0.0, %v390
        %392 = vmatprep.mubr.f32.mxu0 0.0
        %393 = vmatmul.mubr.f32.gmra.mrb[0].mxu0 %v277
        %v394 = vpop.f32.mrb[0].mxu0
        %v395 = vadd.f32 0.0, %v394
        %v396 = vpop.f32.mrb[0].mxu0
        %v397 = vadd.f32 0.0, %v396
        %398 = vmatprep.mubr.f32.mxu0 0.0
        %399 = vmatmul.mubr.f32.gmra.mrb[0].mxu0 %v278
        %v400 = vpop.f32.mrb[0].mxu0
        %v401 = vadd.f32 0.0, %v400
        %v402 = vpop.f32.mrb[0].mxu0
        %v403 = vadd.f32 0.0, %v402
        %404 = vmatprep.mubr.f32.mxu0 0.0
        %405 = vmatmul.mubr.f32.gmra.mrb[0].mxu0 %v279
        %v406 = vpop.f32.mrb[0].mxu0
        %v407 = vadd.f32 0.0, %v406
        %v408 = vpop.f32.mrb[0].mxu0
        %v409 = vadd.f32 0.0, %v408
        %410 = vmatprep.mubr.f32.mxu0 0.0
        %411 = vmatmul.mubr.f32.gmra.mrb[0].mxu0 %v280
        %v412 = vpop.f32.mrb[0].mxu0
        %v413 = vadd.f32 0.0, %v412
        %v414 = vpop.f32.mrb[0].mxu0
        %v415 = vadd.f32 0.0, %v414
        %416 = vmatprep.mubr.f32.mxu0 0.0
        %417 = vmatmul.mubr.f32.gmra.mrb[0].mxu0 %v281
        %v418 = vpop.f32.mrb[0].mxu0
        %v419 = vadd.f32 0.0, %v418
        %v420 = vpop.f32.mrb[0].mxu0
        %v421 = vadd.f32 0.0, %v420
        %422 = vmatprep.mubr.f32.mxu0 0.0
        %423 = vmatmul.mubr.f32.gmra.mrb[0].mxu0 %v282
        %v424 = vpop.f32.mrb[0].mxu0
        %v425 = vadd.f32 0.0, %v424
        %v426 = vpop.f32.mrb[0].mxu0
        %v427 = vadd.f32 0.0, %v426
        %428 = vmatprep.mubr.f32.mxu0 0.0
        %429 = vmatmul.mubr.f32.gmra.mrb[0].mxu0 %v283
        %v430 = vpop.f32.mrb[0].mxu0
        %v431 = vadd.f32 0.0, %v430
        %v432 = vpop.f32.mrb[0].mxu0
        %v433 = vadd.f32 0.0, %v432
        %434 = vmatprep.mubr.f32.mxu0 0.0
        %435 = vmatmul.mubr.f32.gmra.mrb[0].mxu0 %v284
        %v436 = vpop.f32.mrb[0].mxu0
        %v437 = vadd.f32 0.0, %v436
        %v438 = vpop.f32.mrb[0].mxu0
        %v439 = vadd.f32 0.0, %v438
        %440 = vmatprep.mubr.f32.mxu0 0.0
        %441 = vmatmul.mubr.f32.gmra.mrb[0].mxu0 %v285
        %v442 = vpop.f32.mrb[0].mxu0
        %v443 = vadd.f32 0.0, %v442
        %v444 = vpop.f32.mrb[0].mxu0
        %v445 = vadd.f32 0.0, %v444
        %446 = vdwg.mxu0
        %v447 = vmax.f32 %v353, 0.0
        %v448 = vmax.f32 %v355, 0.0
        %v449 = vmax.f32 %v359, 0.0
        %v450 = vmax.f32 %v361, 0.0
        %v451 = vmax.f32 %v365, 0.0
        %v452 = vmax.f32 %v367, 0.0
        %v453 = vmax.f32 %v371, 0.0
        %v454 = vmax.f32 %v373, 0.0
        %v455 = vmax.f32 %v377, 0.0
        %v456 = vmax.f32 %v379, 0.0
        %v457 = vmax.f32 %v383, 0.0
        %v458 = vmax.f32 %v385, 0.0
        %v459 = vmax.f32 %v389, 0.0
        %v460 = vmax.f32 %v391, 0.0
        %v461 = vmax.f32 %v395, 0.0
        %v462 = vmax.f32 %v397, 0.0
        %v463 = vmax.f32 %v401, 0.0
        %v464 = vmax.f32 %v403, 0.0
        %v465 = vmax.f32 %v407, 0.0
        %v466 = vmax.f32 %v409, 0.0
        %v467 = vmax.f32 %v413, 0.0
        %v468 = vmax.f32 %v415, 0.0
        %v469 = vmax.f32 %v419, 0.0
        %v470 = vmax.f32 %v421, 0.0
        %v471 = vmax.f32 %v425, 0.0
        %v472 = vmax.f32 %v427, 0.0
        %v473 = vmax.f32 %v431, 0.0
        %v474 = vmax.f32 %v433, 0.0
        %v475 = vmax.f32 %v437, 0.0
        %v476 = vmax.f32 %v439, 0.0
        %v477 = vmax.f32 %v443, 0.0
        %v478 = vmax.f32 %v445, 0.0
        %479 = vst [vmem:[#allocation2] sm:$0xff] %v447
        %480 = vst [vmem:[#allocation2 + $0x8] sm:$0xff] %v448
        %481 = vst [vmem:[#allocation2 + $0x10] sm:$0xff] %v449
        %482 = vst [vmem:[#allocation2 + $0x18] sm:$0xff] %v450
        %483 = vst [vmem:[#allocation2 + $0x20] sm:$0xff] %v451
        %484 = vst [vmem:[#allocation2 + $0x28] sm:$0xff] %v452
        %485 = vst [vmem:[#allocation2 + $0x30] sm:$0xff] %v453
        %486 = vst [vmem:[#allocation2 + $0x38] sm:$0xff] %v454
        %487 = vst [vmem:[#allocation2 + $0x40] sm:$0xff] %v455
        %488 = vst [vmem:[#allocation2 + $0x48] sm:$0xff] %v456
        %489 = vst [vmem:[#allocation2 + $0x50] sm:$0xff] %v457
        %490 = vst [vmem:[#allocation2 + $0x58] sm:$0xff] %v458
        %491 = vst [vmem:[#allocation2 + $0x60] sm:$0xff] %v459
        %492 = vst [vmem:[#allocation2 + $0x68] sm:$0xff] %v460
        %493 = vst [vmem:[#allocation2 + $0x70] sm:$0xff] %v461
        %494 = vst [vmem:[#allocation2 + $0x78] sm:$0xff] %v462
        %495 = vst [vmem:[#allocation2 + $0x80] sm:$0xff] %v463
        %496 = vst [vmem:[#allocation2 + $0x88] sm:$0xff] %v464
        %497 = vst [vmem:[#allocation2 + $0x90] sm:$0xff] %v465
        %498 = vst [vmem:[#allocation2 + $0x98] sm:$0xff] %v466
        %499 = vst [vmem:[#allocation2 + $0xa0] sm:$0xff] %v467
        %500 = vst [vmem:[#allocation2 + $0xa8] sm:$0xff] %v468
        %501 = vst [vmem:[#allocation2 + $0xb0] sm:$0xff] %v469
        %502 = vst [vmem:[#allocation2 + $0xb8] sm:$0xff] %v470
        %503 = vst [vmem:[#allocation2 + $0xc0] sm:$0xff] %v471
        %504 = vst [vmem:[#allocation2 + $0xc8] sm:$0xff] %v472
        %505 = vst [vmem:[#allocation2 + $0xd0] sm:$0xff] %v473
        %506 = vst [vmem:[#allocation2 + $0xd8] sm:$0xff] %v474
        %507 = vst [vmem:[#allocation2 + $0xe0] sm:$0xff] %v475
        %508 = vst [vmem:[#allocation2 + $0xe8] sm:$0xff] %v476
        %509 = vst [vmem:[#allocation2 + $0xf0] sm:$0xff] %v477
        %510 = vst [vmem:[#allocation2 + $0xf8] sm:$0xff] %v478
        %v511 = vld [vmem:[#allocation8] sm:$0xff]
        %v512 = vld [vmem:[#allocation8 + $0x8] sm:$0xff]
        %v513 = vld [vmem:[#allocation8 + $0x10] sm:$0xff]
        %v514 = vld [vmem:[#allocation8 + $0x18] sm:$0xff]
        %v515 = vld [vmem:[#allocation8 + $0x20] sm:$0xff]
        %v516 = vld [vmem:[#allocation8 + $0x28] sm:$0xff]
        %v517 = vld [vmem:[#allocation8 + $0x30] sm:$0xff]
        %v518 = vld [vmem:[#allocation8 + $0x38] sm:$0xff]
        %v519 = vld [vmem:[#allocation8 + $0x40] sm:$0xff]
        %v520 = vld [vmem:[#allocation8 + $0x48] sm:$0xff]
        %v521 = vld [vmem:[#allocation8 + $0x50] sm:$0xff]
        %v522 = vld [vmem:[#allocation8 + $0x58] sm:$0xff]
        %v523 = vld [vmem:[#allocation8 + $0x60] sm:$0xff]
        %v524 = vld [vmem:[#allocation8 + $0x68] sm:$0xff]
        %v525 = vld [vmem:[#allocation8 + $0x70] sm:$0xff]
        %v526 = vld [vmem:[#allocation8 + $0x78] sm:$0xff]
        %v527 = vld [vmem:[#allocation2] sm:$0xff]
        %v528 = vld [vmem:[#allocation2 + $0x8] sm:$0xff]
        %v529 = vld [vmem:[#allocation2 + $0x10] sm:$0xff]
        %v530 = vld [vmem:[#allocation2 + $0x18] sm:$0xff]
        %v531 = vld [vmem:[#allocation2 + $0x20] sm:$0xff]
        %v532 = vld [vmem:[#allocation2 + $0x28] sm:$0xff]
        %v533 = vld [vmem:[#allocation2 + $0x30] sm:$0xff]
        %v534 = vld [vmem:[#allocation2 + $0x38] sm:$0xff]
        %v535 = vld [vmem:[#allocation2 + $0x40] sm:$0xff]
        %v536 = vld [vmem:[#allocation2 + $0x48] sm:$0xff]
        %v537 = vld [vmem:[#allocation2 + $0x50] sm:$0xff]
        %v538 = vld [vmem:[#allocation2 + $0x58] sm:$0xff]
        %v539 = vld [vmem:[#allocation2 + $0x60] sm:$0xff]
        %v540 = vld [vmem:[#allocation2 + $0x68] sm:$0xff]
        %v541 = vld [vmem:[#allocation2 + $0x70] sm:$0xff]
        %v542 = vld [vmem:[#allocation2 + $0x78] sm:$0xff]
        %v543 = vld [vmem:[#allocation2 + $0x80] sm:$0xff]
        %v544 = vld [vmem:[#allocation2 + $0x88] sm:$0xff]
        %v545 = vld [vmem:[#allocation2 + $0x90] sm:$0xff]
        %v546 = vld [vmem:[#allocation2 + $0x98] sm:$0xff]
        %v547 = vld [vmem:[#allocation2 + $0xa0] sm:$0xff]
        %v548 = vld [vmem:[#allocation2 + $0xa8] sm:$0xff]
        %v549 = vld [vmem:[#allocation2 + $0xb0] sm:$0xff]
        %v550 = vld [vmem:[#allocation2 + $0xb8] sm:$0xff]
        %v551 = vld [vmem:[#allocation2 + $0xc0] sm:$0xff]
        %v552 = vld [vmem:[#allocation2 + $0xc8] sm:$0xff]
        %v553 = vld [vmem:[#allocation2 + $0xd0] sm:$0xff]
        %v554 = vld [vmem:[#allocation2 + $0xd8] sm:$0xff]
        %v555 = vld [vmem:[#allocation2 + $0xe0] sm:$0xff]
        %v556 = vld [vmem:[#allocation2 + $0xe8] sm:$0xff]
        %v557 = vld [vmem:[#allocation2 + $0xf0] sm:$0xff]
        %v558 = vld [vmem:[#allocation2 + $0xf8] sm:$0xff]
        %559 = vmatprep.subr.mxu0 %v528
        %560 = vmatpush1.msra.mxu0 %v527
        %561 = vmatprep.subr.mxu0 %v530
        %562 = vmatpush1.msra.mxu0 %v529
        %563 = vmatprep.subr.mxu0 %v532
        %564 = vmatpush1.msra.mxu0 %v531
        %565 = vmatprep.subr.mxu0 %v534
        %566 = vmatpush1.msra.mxu0 %v533
        %567 = vmatprep.subr.mxu0 %v536
        %568 = vmatpush1.msra.mxu0 %v535
        %569 = vmatprep.subr.mxu0 %v538
        %570 = vmatpush1.msra.mxu0 %v537
        %571 = vmatprep.subr.mxu0 %v540
        %572 = vmatpush1.msra.mxu0 %v539
        %573 = vmatprep.subr.mxu0 %v542
        %574 = vmatpush1.msra.mxu0 %v541
        %575 = vmatprep.subr.mxu0 %v544
        %576 = vmatpush1.msra.mxu0 %v543
        %577 = vmatprep.subr.mxu0 %v546
        %578 = vmatpush1.msra.mxu0 %v545
        %579 = vmatprep.subr.mxu0 %v548
        %580 = vmatpush1.msra.mxu0 %v547
        %581 = vmatprep.subr.mxu0 %v550
        %582 = vmatpush1.msra.mxu0 %v549
        %583 = vmatprep.subr.mxu0 %v552
        %584 = vmatpush1.msra.mxu0 %v551
        %585 = vmatprep.subr.mxu0 %v554
        %586 = vmatpush1.msra.mxu0 %v553
        %587 = vmatprep.subr.mxu0 %v556
        %588 = vmatpush1.msra.mxu0 %v555
        %589 = vmatprep.subr.mxu0 %v558
        %590 = vmatpush1.msra.mxu0 %v557
        %591 = vmatprep.subr.mxu0 0.0
        %592 = vmatpush1.msra.mxu0 0.0
        %593 = vmatprep.subr.mxu0 0.0
        %594 = vmatpush1.msra.mxu0 0.0
        %595 = vmatprep.subr.mxu0 0.0
        %596 = vmatpush1.msra.mxu0 0.0
        %597 = vmatprep.subr.mxu0 0.0
        %598 = vmatpush1.msra.mxu0 0.0
        %599 = vmatprep.subr.mxu0 0.0
        %600 = vmatpush1.msra.mxu0 0.0
        %601 = vmatprep.subr.mxu0 0.0
        %602 = vmatpush1.msra.mxu0 0.0
        %603 = vmatprep.subr.mxu0 0.0
        %604 = vmatpush1.msra.mxu0 0.0
        %605 = vmatprep.subr.mxu0 0.0
        %606 = vmatpush1.msra.mxu0 0.0
        %607 = vmatprep.subr.mxu0 0.0
        %608 = vmatpush1.msra.mxu0 0.0
        %609 = vmatprep.subr.mxu0 0.0
        %610 = vmatpush1.msra.mxu0 0.0
        %611 = vmatprep.subr.mxu0 0.0
        %612 = vmatpush1.msra.mxu0 0.0
        %613 = vmatprep.subr.mxu0 0.0
        %614 = vmatpush1.msra.mxu0 0.0
        %615 = vmatprep.subr.mxu0 0.0
        %616 = vmatpush1.msra.mxu0 0.0
        %617 = vmatprep.subr.mxu0 0.0
        %618 = vmatpush1.msra.mxu0 0.0
        %619 = vmatprep.subr.mxu0 0.0
        %620 = vmatpush1.msra.mxu0 0.0
        %621 = vmatprep.subr.mxu0 0.0
        %622 = vmatpush1.msra.mxu0 0.0
        %623 = vmatprep.mubr.f32.mxu0 0.0
        %624 = vmatmul.mubr.f32.gmra.mrb[0].mxu0 %v511
        %v625 = vpop.f32.mrb[0].mxu0
        %v626 = vadd.f32 0.0, %v625
        %v627 = vpop.f32.mrb[0].mxu0
        %v628 = vadd.f32 0.0, %v627
        %629 = vmatprep.mubr.f32.mxu0 0.0
        %630 = vmatmul.mubr.f32.gmra.mrb[0].mxu0 %v512
        %v631 = vpop.f32.mrb[0].mxu0
        %v632 = vadd.f32 0.0, %v631
        %v633 = vpop.f32.mrb[0].mxu0
        %v634 = vadd.f32 0.0, %v633
        %635 = vmatprep.mubr.f32.mxu0 0.0
        %636 = vmatmul.mubr.f32.gmra.mrb[0].mxu0 %v513
        %v637 = vpop.f32.mrb[0].mxu0
        %v638 = vadd.f32 0.0, %v637
        %v639 = vpop.f32.mrb[0].mxu0
        %v640 = vadd.f32 0.0, %v639
        %641 = vmatprep.mubr.f32.mxu0 0.0
        %642 = vmatmul.mubr.f32.gmra.mrb[0].mxu0 %v514
        %v643 = vpop.f32.mrb[0].mxu0
        %v644 = vadd.f32 0.0, %v643
        %v645 = vpop.f32.mrb[0].mxu0
        %v646 = vadd.f32 0.0, %v645
        %647 = vmatprep.mubr.f32.mxu0 0.0
        %648 = vmatmul.mubr.f32.gmra.mrb[0].mxu0 %v515
        %v649 = vpop.f32.mrb[0].mxu0
        %v650 = vadd.f32 0.0, %v649
        %v651 = vpop.f32.mrb[0].mxu0
        %v652 = vadd.f32 0.0, %v651
        %653 = vmatprep.mubr.f32.mxu0 0.0
        %654 = vmatmul.mubr.f32.gmra.mrb[0].mxu0 %v516
        %v655 = vpop.f32.mrb[0].mxu0
        %v656 = vadd.f32 0.0, %v655
        %v657 = vpop.f32.mrb[0].mxu0
        %v658 = vadd.f32 0.0, %v657
        %659 = vmatprep.mubr.f32.mxu0 0.0
        %660 = vmatmul.mubr.f32.gmra.mrb[0].mxu0 %v517
        %v661 = vpop.f32.mrb[0].mxu0
        %v662 = vadd.f32 0.0, %v661
        %v663 = vpop.f32.mrb[0].mxu0
        %v664 = vadd.f32 0.0, %v663
        %665 = vmatprep.mubr.f32.mxu0 0.0
        %666 = vmatmul.mubr.f32.gmra.mrb[0].mxu0 %v518
        %v667 = vpop.f32.mrb[0].mxu0
        %v668 = vadd.f32 0.0, %v667
        %v669 = vpop.f32.mrb[0].mxu0
        %v670 = vadd.f32 0.0, %v669
        %671 = vmatprep.mubr.f32.mxu0 0.0
        %672 = vmatmul.mubr.f32.gmra.mrb[0].mxu0 %v519
        %v673 = vpop.f32.mrb[0].mxu0
        %v674 = vadd.f32 0.0, %v673
        %v675 = vpop.f32.mrb[0].mxu0
        %v676 = vadd.f32 0.0, %v675
        %677 = vmatprep.mubr.f32.mxu0 0.0
        %678 = vmatmul.mubr.f32.gmra.mrb[0].mxu0 %v520
        %v679 = vpop.f32.mrb[0].mxu0
        %v680 = vadd.f32 0.0, %v679
        %v681 = vpop.f32.mrb[0].mxu0
        %v682 = vadd.f32 0.0, %v681
        %683 = vmatprep.mubr.f32.mxu0 0.0
        %684 = vmatmul.mubr.f32.gmra.mrb[0].mxu0 %v521
        %v685 = vpop.f32.mrb[0].mxu0
        %v686 = vadd.f32 0.0, %v685
        %v687 = vpop.f32.mrb[0].mxu0
        %v688 = vadd.f32 0.0, %v687
        %689 = vmatprep.mubr.f32.mxu0 0.0
        %690 = vmatmul.mubr.f32.gmra.mrb[0].mxu0 %v522
        %v691 = vpop.f32.mrb[0].mxu0
        %v692 = vadd.f32 0.0, %v691
        %v693 = vpop.f32.mrb[0].mxu0
        %v694 = vadd.f32 0.0, %v693
        %695 = vmatprep.mubr.f32.mxu0 0.0
        %696 = vmatmul.mubr.f32.gmra.mrb[0].mxu0 %v523
        %v697 = vpop.f32.mrb[0].mxu0
        %v698 = vadd.f32 0.0, %v697
        %v699 = vpop.f32.mrb[0].mxu0
        %v700 = vadd.f32 0.0, %v699
        %701 = vmatprep.mubr.f32.mxu0 0.0
        %702 = vmatmul.mubr.f32.gmra.mrb[0].mxu0 %v524
        %v703 = vpop.f32.mrb[0].mxu0
        %v704 = vadd.f32 0.0, %v703
        %v705 = vpop.f32.mrb[0].mxu0
        %v706 = vadd.f32 0.0, %v705
        %707 = vmatprep.mubr.f32.mxu0 0.0
        %708 = vmatmul.mubr.f32.gmra.mrb[0].mxu0 %v525
        %v709 = vpop.f32.mrb[0].mxu0
        %v710 = vadd.f32 0.0, %v709
        %v711 = vpop.f32.mrb[0].mxu0
        %v712 = vadd.f32 0.0, %v711
        %713 = vmatprep.mubr.f32.mxu0 0.0
        %714 = vmatmul.mubr.f32.gmra.mrb[0].mxu0 %v526
        %v715 = vpop.f32.mrb[0].mxu0
        %v716 = vadd.f32 0.0, %v715
        %v717 = vpop.f32.mrb[0].mxu0
        %v718 = vadd.f32 0.0, %v717
        %719 = vdwg.mxu0
        %v720 = vmax.f32 %v626, 0.0
        %v721 = vmax.f32 %v628, 0.0
        %v722 = vmax.f32 %v632, 0.0
        %v723 = vmax.f32 %v634, 0.0
        %v724 = vmax.f32 %v638, 0.0
        %v725 = vmax.f32 %v640, 0.0
        %v726 = vmax.f32 %v644, 0.0
        %v727 = vmax.f32 %v646, 0.0
        %v728 = vmax.f32 %v650, 0.0
        %v729 = vmax.f32 %v652, 0.0
        %v730 = vmax.f32 %v656, 0.0
        %v731 = vmax.f32 %v658, 0.0
        %v732 = vmax.f32 %v662, 0.0
        %v733 = vmax.f32 %v664, 0.0
        %v734 = vmax.f32 %v668, 0.0
        %v735 = vmax.f32 %v670, 0.0
        %v736 = vmax.f32 %v674, 0.0
        %v737 = vmax.f32 %v676, 0.0
        %v738 = vmax.f32 %v680, 0.0
        %v739 = vmax.f32 %v682, 0.0
        %v740 = vmax.f32 %v686, 0.0
        %v741 = vmax.f32 %v688, 0.0
        %v742 = vmax.f32 %v692, 0.0
        %v743 = vmax.f32 %v694, 0.0
        %v744 = vmax.f32 %v698, 0.0
        %v745 = vmax.f32 %v700, 0.0
        %v746 = vmax.f32 %v704, 0.0
        %v747 = vmax.f32 %v706, 0.0
        %v748 = vmax.f32 %v710, 0.0
        %v749 = vmax.f32 %v712, 0.0
        %v750 = vmax.f32 %v716, 0.0
        %v751 = vmax.f32 %v718, 0.0
        %752 = vst [vmem:[%s235] sm:$0xff] %v720
        %753 = vst [vmem:[%s235 + $0x8] sm:$0xff] %v721
        %754 = vst [vmem:[%s235 + $0x10] sm:$0xff] %v722
        %755 = vst [vmem:[%s235 + $0x18] sm:$0xff] %v723
        %756 = vst [vmem:[%s235 + $0x20] sm:$0xff] %v724
        %757 = vst [vmem:[%s235 + $0x28] sm:$0xff] %v725
        %758 = vst [vmem:[%s235 + $0x30] sm:$0xff] %v726
        %759 = vst [vmem:[%s235 + $0x38] sm:$0xff] %v727
        %760 = vst [vmem:[%s235 + $0x40] sm:$0xff] %v728
        %761 = vst [vmem:[%s235 + $0x48] sm:$0xff] %v729
        %762 = vst [vmem:[%s235 + $0x50] sm:$0xff] %v730
        %763 = vst [vmem:[%s235 + $0x58] sm:$0xff] %v731
        %764 = vst [vmem:[%s235 + $0x60] sm:$0xff] %v732
        %765 = vst [vmem:[%s235 + $0x68] sm:$0xff] %v733
        %766 = vst [vmem:[%s235 + $0x70] sm:$0xff] %v734
        %767 = vst [vmem:[%s235 + $0x78] sm:$0xff] %v735
        %768 = vst [vmem:[%s235 + $0x80] sm:$0xff] %v736
        %769 = vst [vmem:[%s235 + $0x88] sm:$0xff] %v737
        %770 = vst [vmem:[%s235 + $0x90] sm:$0xff] %v738
        %771 = vst [vmem:[%s235 + $0x98] sm:$0xff] %v739
        %772 = vst [vmem:[%s235 + $0xa0] sm:$0xff] %v740
        %773 = vst [vmem:[%s235 + $0xa8] sm:$0xff] %v741
        %774 = vst [vmem:[%s235 + $0xb0] sm:$0xff] %v742
        %775 = vst [vmem:[%s235 + $0xb8] sm:$0xff] %v743
        %776 = vst [vmem:[%s235 + $0xc0] sm:$0xff] %v744
        %777 = vst [vmem:[%s235 + $0xc8] sm:$0xff] %v745
        %778 = vst [vmem:[%s235 + $0xd0] sm:$0xff] %v746
        %779 = vst [vmem:[%s235 + $0xd8] sm:$0xff] %v747
        %780 = vst [vmem:[%s235 + $0xe0] sm:$0xff] %v748
        %781 = vst [vmem:[%s235 + $0xe8] sm:$0xff] %v749
        %782 = vst [vmem:[%s235 + $0xf0] sm:$0xff] %v750
        %783 = vst [vmem:[%s235 + $0xf8] sm:$0xff] %v751
        %s784 = sand.u32 %s113, 1
        %s785 = scalar_lea.sflag [#allocation5], %s784
        %s786 = sand.u32 %s113, 1
        %s787 = smul.addr %s786, 256
        %s788 = scalar_lea.vmem [#allocation9], %s787
        // Predicated region
        $region45: #{tpu_custom_call.1} parent=31 // pred_check
          %p789 = pneg %p123
        $region46: #{tpu_custom_call.1} parent=31 // pred_check_branch
          %791 = sbr.rel (%p789) target = $region48
        $region47: #{tpu_custom_call.1} parent=31 // pred_region
          %s792 = smul.u32 2, %s26
          %s794 = ssub.s32 4096, 4096
          %795 = vsyncadd %s785, %s794
          %s796 = smul.addr %s25, 64
          %s797 = sadd.s32 %s792, %s796
          %s798 = smul.addr %s797, 128
          %s799 = scalar_lea.hbm %s3, %s798
          %s800 = sshll.u32 %s788, 4
          %s801 = int_to_ptr.vmem [resolvable:$true] %s800
          %806 = dma.vmem_to_hbm [thread:$0]  %s801, 4096, %s799, %s785, 256, 512, 16
        $region48: #{tpu_custom_call.1} parent=31 // pred_fallthru
          _
      $region32: #{tpu_custom_call.1} parent=5 // pred_fallthru
        _
      %p807 = scmp.le.s32.totalorder 2, %s16
      // Predicated region
      $region49: #{tpu_custom_call.1} parent=5 // pred_check
        %p808 = pneg %p807
      $region50: #{tpu_custom_call.1} parent=5 // pred_check_branch
        %810 = sbr.rel (%p808) target = $region52
      $region51: #{tpu_custom_call.1} parent=5 // pred_region
        %s811 = ssub.s32 %s16, 2
        // Predicated region
        $region53: #{tpu_custom_call.1} parent=51 // pred_check
          %p812 = pneg %p129
        $region54: #{tpu_custom_call.1} parent=51 // pred_check_branch
          %814 = sbr.rel (%p812) target = $region56
        $region55: #{tpu_custom_call.1} parent=51 // pred_region
          %s815 = sand.u32 %s114, 1
          %s816 = scalar_lea.sflag [#allocation5], %s815
          %s817 = sand.u32 %s114, 1
          %s818 = smul.addr %s817, 256
          %s819 = scalar_lea.vmem [#allocation9], %s818
          %820 = dma.done %s816, 4096
        $region56: #{tpu_custom_call.1} parent=51 // pred_fallthru
          _
      $region52: #{tpu_custom_call.1} parent=5 // pred_fallthru
        _
    $region6: #{tpu_custom_call.1} parent=1 // loop_footer
      %s20 = sadd.s32 1, %s16
    $region7: #{tpu_custom_call.1} parent=1 // loop_footer_branch
      %15 = sbr.rel target = $region3
    $region8: #{tpu_custom_call.1} parent=1 // loop_exit
      _
    %821 = vsyncpa [#allocation4], 1
    %s822 = scalar_lea.sflag [#allocation4], 1
    %823 = vsyncpa %s822, 1
    %824 = vsyncpa [#allocation7], 1
    %825 = vsyncpa [#allocation5], 1
    %s826 = scalar_lea.sflag [#allocation5], 1
    %827 = vsyncpa %s826, 1

// kernel: tpu_custom_call.1
$region0: #{tpu_custom_call.1}
  #allocation0 [shape = 'u32[]', space=smem, size = 0x4, offset = 0x4, fixed_abs, tag = 'smem constant byte address 0x4 - core index']
  #allocation1 [shape = 'u32[144,128]{1,0:T(1,128)}', space=vmem, size = 0x12000, scoped, tag = 'internal scratch']
  #allocation2 [shape = 'f32[128,256]{1,0:T(8,128)}', space=vmem, size = 0x20000, scoped, tag = 'scratch operand']
  %s0 = inlined_call_operand.hbm [shape: f32[2,128,512], index: 0, kind: input, shape index: {}]
  %s1 = inlined_call_operand.hbm [shape: f32[128,128], index: 1, kind: input, shape index: {}]
  %s2 = inlined_call_operand.hbm [shape: f32[128,128], index: 2, kind: input, shape index: {}]
  %s3 = inlined_call_operand.hbm [shape: f32[2,128,512], index: 3, kind: output, shape index: {}]
  %s4 = sld [smem:[#allocation0]]
  $region57: #{tpu_custom_call.1} parent=0
    _
  %s6 = ssub.s32 1, %s4
  %s7 = scalar_select 0, %s6, %s4
  $region1: #{tpu_custom_call.1} parent=0
    #allocation3 [shape = 'u8[262144]{0}', space=vmem, size = 0x40000, scoped, tag = 'input window, operand 0']
    #allocation4 [shape = 's32[2]{0}', space=sflag, size = 0x8, scoped, tag = 'scoped memory for tpu_custom_call.1']
    #allocation5 [shape = 's32[2]{0}', space=sflag, size = 0x8, scoped, tag = 'scoped memory for tpu_custom_call.1']
    #allocation6 [shape = 'u8[65536]{0}', space=vmem, size = 0x10000, scoped, tag = 'input window, operand 1, single buffered']
    #allocation7 [shape = 's32[1]{0}', space=sflag, size = 0x4, scoped, tag = 'scoped memory for tpu_custom_call.1']
    #allocation8 [shape = 'u8[65536]{0}', space=vmem, size = 0x10000, scoped, tag = 'input window, operand 2, single buffered']
    #allocation9 [shape = 'u8[262144]{0}', space=vmem, size = 0x40000, scoped, tag = 'output window, operand 0']
    %8 = vsyncpa [#allocation4], 0
    %s9 = scalar_lea.sflag [#allocation4], 1
    %10 = vsyncpa %s9, 0
    %11 = vsyncpa [#allocation7], 0
    %12 = vsyncpa [#allocation5], 0
    %s13 = scalar_lea.sflag [#allocation5], 1
    %14 = vsyncpa %s13, 0
    loop: start=0, step=1, limit=6
    $region2: #{tpu_custom_call.1} parent=1 // loop_pre_header
      _
    $region3: #{tpu_custom_call.1} parent=1 // loop_header
      %s16 = sphi 0, %s20
      %p17 = scmp.ge.s32.totalorder %s16, 6
      %s23 = sphi 0, %s35
      %s24 = sphi 0, %s31
      %s25 = sphi 0, %s23
      %s26 = sphi 0, %s24
      %s27 = sphi 0, %s25
      %s28 = sphi 0, %s26
      %s40 = sphi 0, %s42
      %s43 = sphi 0, %s40
      %s44 = sphi 0, %s43
      %s60 = sphi 0, %s44
      %s64 = sphi 0, %s64
      %s66 = sphi 0, %s64
      %s67 = sphi 0, %s66
      %s81 = sphi 0, %s67
      %s85 = sphi 0, %s85
      %s87 = sphi 0, %s85
      %s88 = sphi 0, %s87
      %s102 = sphi 0, %s88
      %s110 = sphi 0, %s112
      %s113 = sphi 0, %s110
      %s114 = sphi 0, %s113
      %s130 = sphi 0, %s114
    $region4: #{tpu_custom_call.1} parent=1 // loop_header_branch
      %19 = sbr.rel (%p17) target = $region8
    $region5: #{tpu_custom_call.1} parent=1 // loop_body
      %s21 = ssub.s32 %s16, 1
      %s22 = ssub.s32 %s16, 2
      %s29 = sadd.s32 1, %s24
      %p30 = scmp.ge.s32.totalorder %s29, 2
      %s31 = scalar_select %p30, 0, %s29
      %s32 = sadd.s32 1, %s23
      %s33 = scalar_select %p30, %s32, %s23
      %p34 = scmp.ge.s32.totalorder %s33, 2
      %s35 = scalar_select %p34, 0, %s33
      %s36 = ssub.s32 %s23, %s35
      %s37 = ssub.s32 %s24, %s31
      %s38 = sor.u32 %s36, %s37
      %p39 = scmp.eq.s32.totalorder %s38, 0
      %s41 = sadd.s32 %s40, 1
      %s42 = scalar_select %p39, %s40, %s41
      %p45 = pneg %p39
      %p46 = scmp.eq.s32.totalorder %s16, 3
      %p47 = por %p45, %p46
      %p48 = scmp.ne.s32.totalorder %s40, %s43
      %p49 = scmp.eq.s32.totalorder %s16, 0
      %p50 = por %p48, %p49
      %p51 = scmp.ne.s32.totalorder %s40, %s43
      %p52 = scmp.eq.s32.totalorder %s21, 3
      %p53 = por %p51, %p52
      %p54 = scmp.ne.s32.totalorder %s43, %s44
      %p55 = scmp.eq.s32.totalorder %s21, 0
      %p56 = por %p54, %p55
      %p57 = scmp.ne.s32.totalorder %s43, %s44
      %p58 = scmp.eq.s32.totalorder %s22, 3
      %p59 = por %p57, %p58
      %p61 = scmp.ne.s32.totalorder %s44, %s60
      %p62 = scmp.eq.s32.totalorder %s22, 0
      %p63 = por %p61, %p62
      %s65 = sadd.s32 %s64, 1
      %p68 = scmp.eq.s32.totalorder %s16, 3
      %p69 = scmp.ne.s32.totalorder %s64, %s66
      %p70 = scmp.eq.s32.totalorder %s16, 0
      %p71 = por %p69, %p70
      %p72 = scmp.ne.s32.totalorder %s64, %s66
      %p73 = scmp.eq.s32.totalorder %s21, 3
      %p74 = por %p72, %p73
      %p75 = scmp.ne.s32.totalorder %s66, %s67
      %p76 = scmp.eq.s32.totalorder %s21, 0
      %p77 = por %p75, %p76
      %p78 = scmp.ne.s32.totalorder %s66, %s67
      %p79 = scmp.eq.s32.totalorder %s22, 3
      %p80 = por %p78, %p79
      %p82 = scmp.ne.s32.totalorder %s67, %s81
      %p83 = scmp.eq.s32.totalorder %s22, 0
      %p84 = por %p82, %p83
      %s86 = sadd.s32 %s85, 1
      %p89 = scmp.eq.s32.totalorder %s16, 3
      %p90 = scmp.ne.s32.totalorder %s85, %s87
      %p91 = scmp.eq.s32.totalorder %s16, 0
      %p92 = por %p90, %p91
      %p93 = scmp.ne.s32.totalorder %s85, %s87
      %p94 = scmp.eq.s32.totalorder %s21, 3
      %p95 = por %p93, %p94
      %p96 = scmp.ne.s32.totalorder %s87, %s88
      %p97 = scmp.eq.s32.totalorder %s21, 0
      %p98 = por %p96, %p97
      %p99 = scmp.ne.s32.totalorder %s87, %s88
      %p100 = scmp.eq.s32.totalorder %s22, 3
      %p101 = por %p99, %p100
      %p103 = scmp.ne.s32.totalorder %s88, %s102
      %p104 = scmp.eq.s32.totalorder %s22, 0
      %p105 = por %p103, %p104
      %s106 = ssub.s32 %s23, %s35
      %s107 = ssub.s32 %s24, %s31
      %s108 = sor.u32 %s106, %s107
      %p109 = scmp.eq.s32.totalorder %s108, 0
      %s111 = sadd.s32 %s110, 1
      %s112 = scalar_select %p109, %s110, %s111
      %p115 = pneg %p109
      %p116 = scmp.eq.s32.totalorder %s16, 3
      %p117 = por %p115, %p116
      %p118 = scmp.ne.s32.totalorder %s110, %s113
      %p119 = scmp.eq.s32.totalorder %s16, 0
      %p120 = por %p118, %p119
      %p121 = scmp.ne.s32.totalorder %s110, %s113
      %p122 = scmp.eq.s32.totalorder %s21, 3
      %p123 = por %p121, %p122
      %p124 = scmp.ne.s32.totalorder %s113, %s114
      %p125 = scmp.eq.s32.totalorder %s21, 0
      %p126 = por %p124, %p125
      %p127 = scmp.ne.s32.totalorder %s113, %s114
      %p128 = scmp.eq.s32.totalorder %s22, 3
      %p129 = por %p127, %p128
      %p131 = scmp.ne.s32.totalorder %s114, %s130
      %p132 = scmp.eq.s32.totalorder %s22, 0
      %p133 = por %p131, %p132
      %p134 = scmp.le.s32.totalorder 1, %s16
      %p135 = scmp.lt.s32.totalorder %s16, 5
      %p136 = pnand %p134, %p135
      %p137 = pneg %p136
      // Predicated region
      $region9: #{tpu_custom_call.1} parent=5 // pred_check
        _
      $region10: #{tpu_custom_call.1} parent=5 // pred_check_branch
        %139 = sbr.rel (%p136) target = $region12
      $region11: #{tpu_custom_call.1} parent=5 // pred_region
        %s140 = ssub.s32 %s16, 1
        // Predicated region
        $region13: #{tpu_custom_call.1} parent=11 // pred_check
          %p141 = pneg %p77
        $region14: #{tpu_custom_call.1} parent=11 // pred_check_branch
          %143 = sbr.rel (%p141) target = $region16
        $region15: #{tpu_custom_call.1} parent=11 // pred_region
          %s145 = ssub.s32 2048, 2048
          %146 = vsyncadd [#allocation7], %s145
          %s147 = sshll.u32 [#allocation6], 4
          %s148 = int_to_ptr.vmem [resolvable:$true] %s147
          %153 = dma.hbm_to_vmem [thread:$0]  %s1, 2048, %s148, [#allocation7], 128, 128, 8
        $region16: #{tpu_custom_call.1} parent=11 // pred_fallthru
          _
        // Predicated region
        $region17: #{tpu_custom_call.1} parent=11 // pred_check
          %p154 = pneg %p98
        $region18: #{tpu_custom_call.1} parent=11 // pred_check_branch
          %156 = sbr.rel (%p154) target = $region20
        $region19: #{tpu_custom_call.1} parent=11 // pred_region
          %s158 = ssub.s32 2048, 2048
          %159 = vsyncadd [#allocation7], %s158
          %s160 = sshll.u32 [#allocation8], 4
          %s161 = int_to_ptr.vmem [resolvable:$true] %s160
          %166 = dma.hbm_to_vmem [thread:$0]  %s2, 2048, %s161, [#allocation7], 128, 128, 8
        $region20: #{tpu_custom_call.1} parent=11 // pred_fallthru
          _
      $region12: #{tpu_custom_call.1} parent=5 // pred_fallthru
        _
      %p167 = scmp.lt.s32.totalorder %s16, 4
      // Predicated region
      $region21: #{tpu_custom_call.1} parent=5 // pred_check
        %p168 = pneg %p167
      $region22: #{tpu_custom_call.1} parent=5 // pred_check_branch
        %170 = sbr.rel (%p168) target = $region24
      $region23: #{tpu_custom_call.1} parent=5 // pred_region
        // Predicated region
        $region25: #{tpu_custom_call.1} parent=23 // pred_check
          %p171 = pneg %p50
        $region26: #{tpu_custom_call.1} parent=23 // pred_check_branch
          %173 = sbr.rel (%p171) target = $region28
        $region27: #{tpu_custom_call.1} parent=23 // pred_region
          %s174 = sand.u32 %s40, 1
          %s175 = scalar_lea.sflag [#allocation4], %s174
          %s176 = sand.u32 %s40, 1
          %s177 = smul.addr %s176, 256
          %s178 = scalar_lea.vmem [#allocation3], %s177
          %s179 = smul.u32 2, %s24
          %s181 = ssub.s32 4096, 4096
          %182 = vsyncadd %s175, %s181
          %s183 = smul.addr %s23, 64
          %s184 = sadd.s32 %s179, %s183
          %s185 = smul.addr %s184, 128
          %s186 = scalar_lea.hbm %s0, %s185
          %s187 = sshll.u32 %s178, 4
          %s188 = int_to_ptr.vmem [resolvable:$true] %s187
          %193 = dma.hbm_to_vmem [thread:$0]  %s186, 4096, %s188, %s175, 512, 256, 16
        $region28: #{tpu_custom_call.1} parent=23 // pred_fallthru
          _
      $region24: #{tpu_custom_call.1} parent=5 // pred_fallthru
        _
      %p194 = scmp.le.s32.totalorder 1, %s16
      %p195 = scmp.lt.s32.totalorder %s16, 5
      %p196 = pnand %p194, %p195
      %p197 = pneg %p196
      // Predicated region
      $region29: #{tpu_custom_call.1} parent=5 // pred_check
        _
      $region30: #{tpu_custom_call.1} parent=5 // pred_check_branch
        %199 = sbr.rel (%p196) target = $region32
      $region31: #{tpu_custom_call.1} parent=5 // pred_region
        %s200 = ssub.s32 %s16, 1
        %s201 = sand.u32 %s43, 1
        %s202 = scalar_lea.sflag [#allocation4], %s201
        %s203 = sand.u32 %s43, 1
        %s204 = smul.addr %s203, 256
        %s205 = scalar_lea.vmem [#allocation3], %s204
        // Predicated region
        $region33: #{tpu_custom_call.1} parent=31 // pred_check
          %p206 = pneg %p56
        $region34: #{tpu_custom_call.1} parent=31 // pred_check_branch
          %208 = sbr.rel (%p206) target = $region36
        $region35: #{tpu_custom_call.1} parent=31 // pred_region
          %209 = dma.done %s202, 4096
        $region36: #{tpu_custom_call.1} parent=31 // pred_fallthru
          _
        // Predicated region
        $region37: #{tpu_custom_call.1} parent=31 // pred_check
          %p210 = pneg %p77
        $region38: #{tpu_custom_call.1} parent=31 // pred_check_branch
          %212 = sbr.rel (%p210) target = $region40
        $region39: #{tpu_custom_call.1} parent=31 // pred_region
          %213 = dma.done [#allocation7], 2048
        $region40: #{tpu_custom_call.1} parent=31 // pred_fallthru
          _
        // Predicated region
        $region41: #{tpu_custom_call.1} parent=31 // pred_check
          %p214 = pneg %p98
        $region42: #{tpu_custom_call.1} parent=31 // pred_check_branch
          %216 = sbr.rel (%p214) target = $region44
        $region43: #{tpu_custom_call.1} parent=31 // pred_region
          %217 = dma.done [#allocation7], 2048
        $region44: #{tpu_custom_call.1} parent=31 // pred_fallthru
          _
        %s218 = sand.u32 %s43, 1
        %s219 = scalar_lea.sflag [#allocation4], %s218
        %s220 = sand.u32 %s43, 1
        %s221 = smul.addr %s220, 256
        %s222 = scalar_lea.vmem [#allocation3], %s221
        %p223 = pneg %p56
        %p224 = pneg %p53
        %p225 = pneg %p77
        %p226 = pneg %p74
        %p227 = pneg %p98
        %p228 = pneg %p95
        %p229 = pneg %p126
        %p230 = pneg %p123
        %s231 = sand.u32 %s113, 1
        %s232 = scalar_lea.sflag [#allocation5], %s231
        %s233 = sand.u32 %s113, 1
        %s234 = smul.addr %s233, 256
        %s235 = scalar_lea.vmem [#allocation9], %s234
        %s236 = smul.u32 2, %s26
        %s237 = smul.u32 2, %s26
        %v238 = vld [vmem:[%s205] sm:$0xff]
        %v239 = vld [vmem:[%s205 + $0x8] sm:$0xff]
        %v240 = vld [vmem:[%s205 + $0x10] sm:$0xff]
        %v241 = vld [vmem:[%s205 + $0x18] sm:$0xff]
        %v242 = vld [vmem:[%s205 + $0x20] sm:$0xff]
        %v243 = vld [vmem:[%s205 + $0x28] sm:$0xff]
        %v244 = vld [vmem:[%s205 + $0x30] sm:$0xff]
        %v245 = vld [vmem:[%s205 + $0x38] sm:$0xff]
        %v246 = vld [vmem:[%s205 + $0x40] sm:$0xff]
        %v247 = vld [vmem:[%s205 + $0x48] sm:$0xff]
        %v248 = vld [vmem:[%s205 + $0x50] sm:$0xff]
        %v249 = vld [vmem:[%s205 + $0x58] sm:$0xff]
        %v250 = vld [vmem:[%s205 + $0x60] sm:$0xff]
        %v251 = vld [vmem:[%s205 + $0x68] sm:$0xff]
        %v252 = vld [vmem:[%s205 + $0x70] sm:$0xff]
        %v253 = vld [vmem:[%s205 + $0x78] sm:$0xff]
        %v254 = vld [vmem:[%s205 + $0x80] sm:$0xff]
        %v255 = vld [vmem:[%s205 + $0x88] sm:$0xff]
        %v256 = vld [vmem:[%s205 + $0x90] sm:$0xff]
        %v257 = vld [vmem:[%s205 + $0x98] sm:$0xff]
        %v258 = vld [vmem:[%s205 + $0xa0] sm:$0xff]
        %v259 = vld [vmem:[%s205 + $0xa8] sm:$0xff]
        %v260 = vld [vmem:[%s205 + $0xb0] sm:$0xff]
        %v261 = vld [vmem:[%s205 + $0xb8] sm:$0xff]
        %v262 = vld [vmem:[%s205 + $0xc0] sm:$0xff]
        %v263 = vld [vmem:[%s205 + $0xc8] sm:$0xff]
        %v264 = vld [vmem:[%s205 + $0xd0] sm:$0xff]
        %v265 = vld [vmem:[%s205 + $0xd8] sm:$0xff]
        %v266 = vld [vmem:[%s205 + $0xe0] sm:$0xff]
        %v267 = vld [vmem:[%s205 + $0xe8] sm:$0xff]
        %v268 = vld [vmem:[%s205 + $0xf0] sm:$0xff]
        %v269 = vld [vmem:[%s205 + $0xf8] sm:$0xff]
        %v270 = vld [vmem:[#allocation6] sm:$0xff]
        %v271 = vld [vmem:[#allocation6 + $0x8] sm:$0xff]
        %v272 = vld [vmem:[#allocation6 + $0x10] sm:$0xff]
        %v273 = vld [vmem:[#allocation6 + $0x18] sm:$0xff]
        %v274 = vld [vmem:[#allocation6 + $0x20] sm:$0xff]
        %v275 = vld [vmem:[#allocation6 + $0x28] sm:$0xff]
        %v276 = vld [vmem:[#allocation6 + $0x30] sm:$0xff]
        %v277 = vld [vmem:[#allocation6 + $0x38] sm:$0xff]
        %v278 = vld [vmem:[#allocation6 + $0x40] sm:$0xff]
        %v279 = vld [vmem:[#allocation6 + $0x48] sm:$0xff]
        %v280 = vld [vmem:[#allocation6 + $0x50] sm:$0xff]
        %v281 = vld [vmem:[#allocation6 + $0x58] sm:$0xff]
        %v282 = vld [vmem:[#allocation6 + $0x60] sm:$0xff]
        %v283 = vld [vmem:[#allocation6 + $0x68] sm:$0xff]
        %v284 = vld [vmem:[#allocation6 + $0x70] sm:$0xff]
        %v285 = vld [vmem:[#allocation6 + $0x78] sm:$0xff]
        %286 = vmatprep.subr.mxu0 %v239
        %287 = vmatpush1.msra.mxu0 %v238
        %288 = vmatprep.subr.mxu0 %v241
        %289 = vmatpush1.msra.mxu0 %v240
        %290 = vmatprep.subr.mxu0 %v243
        %291 = vmatpush1.msra.mxu0 %v242
        %292 = vmatprep.subr.mxu0 %v245
        %293 = vmatpush1.msra.mxu0 %v244
        %294 = vmatprep.subr.mxu0 %v247
        %295 = vmatpush1.msra.mxu0 %v246
        %296 = vmatprep.subr.mxu0 %v249
        %297 = vmatpush1.msra.mxu0 %v248
        %298 = vmatprep.subr.mxu0 %v251
        %299 = vmatpush1.msra.mxu0 %v250
        %300 = vmatprep.subr.mxu0 %v253
        %301 = vmatpush1.msra.mxu0 %v252
        %302 = vmatprep.subr.mxu0 %v255
        %303 = vmatpush1.msra.mxu0 %v254
        %304 = vmatprep.subr.mxu0 %v257
        %305 = vmatpush1.msra.mxu0 %v256
        %306 = vmatprep.subr.mxu0 %v259
        %307 = vmatpush1.msra.mxu0 %v258
        %308 = vmatprep.subr.mxu0 %v261
        %309 = vmatpush1.msra.mxu0 %v260
        %310 = vmatprep.subr.mxu0 %v263
        %311 = vmatpush1.msra.mxu0 %v262
        %312 = vmatprep.subr.mxu0 %v265
        %313 = vmatpush1.msra.mxu0 %v264
        %314 = vmatprep.subr.mxu0 %v267
        %315 = vmatpush1.msra.mxu0 %v266
        %316 = vmatprep.subr.mxu0 %v269
        %317 = vmatpush1.msra.mxu0 %v268
        %318 = vmatprep.subr.mxu0 0.0
        %319 = vmatpush1.msra.mxu0 0.0
        %320 = vmatprep.subr.mxu0 0.0
        %321 = vmatpush1.msra.mxu0 0.0
        %322 = vmatprep.subr.mxu0 0.0
        %323 = vmatpush1.msra.mxu0 0.0
        %324 = vmatprep.subr.mxu0 0.0
        %325 = vmatpush1.msra.mxu0 0.0
        %326 = vmatprep.subr.mxu0 0.0
        %327 = vmatpush1.msra.mxu0 0.0
        %328 = vmatprep.subr.mxu0 0.0
        %329 = vmatpush1.msra.mxu0 0.0
        %330 = vmatprep.subr.mxu0 0.0
        %331 = vmatpush1.msra.mxu0 0.0
        %332 = vmatprep.subr.mxu0 0.0
        %333 = vmatpush1.msra.mxu0 0.0
        %334 = vmatprep.subr.mxu0 0.0
        %335 = vmatpush1.msra.mxu0 0.0
        %336 = vmatprep.subr.mxu0 0.0
        %337 = vmatpush1.msra.mxu0 0.0
        %338 = vmatprep.subr.mxu0 0.0
        %339 = vmatpush1.msra.mxu0 0.0
        %340 = vmatprep.subr.mxu0 0.0
        %341 = vmatpush1.msra.mxu0 0.0
        %342 = vmatprep.subr.mxu0 0.0
        %343 = vmatpush1.msra.mxu0 0.0
        %344 = vmatprep.subr.mxu0 0.0
        %345 = vmatpush1.msra.mxu0 0.0
        %346 = vmatprep.subr.mxu0 0.0
        %347 = vmatpush1.msra.mxu0 0.0
        %348 = vmatprep.subr.mxu0 0.0
        %349 = vmatpush1.msra.mxu0 0.0
        %350 = vmatprep.mubr.f32.mxu0 0.0
        %351 = vmatmul.mubr.f32.gmra.mrb[0].mxu0 %v270
        %v352 = vpop.f32.mrb[0].mxu0
        %v353 = vadd.f32 0.0, %v352
        %v354 = vpop.f32.mrb[0].mxu0
        %v355 = vadd.f32 0.0, %v354
        %356 = vmatprep.mubr.f32.mxu0 0.0
        %357 = vmatmul.mubr.f32.gmra.mrb[0].mxu0 %v271
        %v358 = vpop.f32.mrb[0].mxu0
        %v359 = vadd.f32 0.0, %v358
        %v360 = vpop.f32.mrb[0].mxu0
        %v361 = vadd.f32 0.0, %v360
        %362 = vmatprep.mubr.f32.mxu0 0.0
        %363 = vmatmul.mubr.f32.gmra.mrb[0].mxu0 %v272
        %v364 = vpop.f32.mrb[0].mxu0
        %v365 = vadd.f32 0.0, %v364
        %v366 = vpop.f32.mrb[0].mxu0
        %v367 = vadd.f32 0.0, %v366
        %368 = vmatprep.mubr.f32.mxu0 0.0
        %369 = vmatmul.mubr.f32.gmra.mrb[0].mxu0 %v273
        %v370 = vpop.f32.mrb[0].mxu0
        %v371 = vadd.f32 0.0, %v370
        %v372 = vpop.f32.mrb[0].mxu0
        %v373 = vadd.f32 0.0, %v372
        %374 = vmatprep.mubr.f32.mxu0 0.0
        %375 = vmatmul.mubr.f32.gmra.mrb[0].mxu0 %v274
        %v376 = vpop.f32.mrb[0].mxu0
        %v377 = vadd.f32 0.0, %v376
        %v378 = vpop.f32.mrb[0].mxu0
        %v379 = vadd.f32 0.0, %v378
        %380 = vmatprep.mubr.f32.mxu0 0.0
        %381 = vmatmul.mubr.f32.gmra.mrb[0].mxu0 %v275
        %v382 = vpop.f32.mrb[0].mxu0
        %v383 = vadd.f32 0.0, %v382
        %v384 = vpop.f32.mrb[0].mxu0
        %v385 = vadd.f32 0.0, %v384
        %386 = vmatprep.mubr.f32.mxu0 0.0
        %387 = vmatmul.mubr.f32.gmra.mrb[0].mxu0 %v276
        %v388 = vpop.f32.mrb[0].mxu0
        %v389 = vadd.f32 0.0, %v388
        %v390 = vpop.f32.mrb[0].mxu0
        %v391 = vadd.f32 0.0, %v390
        %392 = vmatprep.mubr.f32.mxu0 0.0
        %393 = vmatmul.mubr.f32.gmra.mrb[0].mxu0 %v277
        %v394 = vpop.f32.mrb[0].mxu0
        %v395 = vadd.f32 0.0, %v394
        %v396 = vpop.f32.mrb[0].mxu0
        %v397 = vadd.f32 0.0, %v396
        %398 = vmatprep.mubr.f32.mxu0 0.0
        %399 = vmatmul.mubr.f32.gmra.mrb[0].mxu0 %v278
        %v400 = vpop.f32.mrb[0].mxu0
        %v401 = vadd.f32 0.0, %v400
        %v402 = vpop.f32.mrb[0].mxu0
        %v403 = vadd.f32 0.0, %v402
        %404 = vmatprep.mubr.f32.mxu0 0.0
        %405 = vmatmul.mubr.f32.gmra.mrb[0].mxu0 %v279
        %v406 = vpop.f32.mrb[0].mxu0
        %v407 = vadd.f32 0.0, %v406
        %v408 = vpop.f32.mrb[0].mxu0
        %v409 = vadd.f32 0.0, %v408
        %410 = vmatprep.mubr.f32.mxu0 0.0
        %411 = vmatmul.mubr.f32.gmra.mrb[0].mxu0 %v280
        %v412 = vpop.f32.mrb[0].mxu0
        %v413 = vadd.f32 0.0, %v412
        %v414 = vpop.f32.mrb[0].mxu0
        %v415 = vadd.f32 0.0, %v414
        %416 = vmatprep.mubr.f32.mxu0 0.0
        %417 = vmatmul.mubr.f32.gmra.mrb[0].mxu0 %v281
        %v418 = vpop.f32.mrb[0].mxu0
        %v419 = vadd.f32 0.0, %v418
        %v420 = vpop.f32.mrb[0].mxu0
        %v421 = vadd.f32 0.0, %v420
        %422 = vmatprep.mubr.f32.mxu0 0.0
        %423 = vmatmul.mubr.f32.gmra.mrb[0].mxu0 %v282
        %v424 = vpop.f32.mrb[0].mxu0
        %v425 = vadd.f32 0.0, %v424
        %v426 = vpop.f32.mrb[0].mxu0
        %v427 = vadd.f32 0.0, %v426
        %428 = vmatprep.mubr.f32.mxu0 0.0
        %429 = vmatmul.mubr.f32.gmra.mrb[0].mxu0 %v283
        %v430 = vpop.f32.mrb[0].mxu0
        %v431 = vadd.f32 0.0, %v430
        %v432 = vpop.f32.mrb[0].mxu0
        %v433 = vadd.f32 0.0, %v432
        %434 = vmatprep.mubr.f32.mxu0 0.0
        %435 = vmatmul.mubr.f32.gmra.mrb[0].mxu0 %v284
        %v436 = vpop.f32.mrb[0].mxu0
        %v437 = vadd.f32 0.0, %v436
        %v438 = vpop.f32.mrb[0].mxu0
        %v439 = vadd.f32 0.0, %v438
        %440 = vmatprep.mubr.f32.mxu0 0.0
        %441 = vmatmul.mubr.f32.gmra.mrb[0].mxu0 %v285
        %v442 = vpop.f32.mrb[0].mxu0
        %v443 = vadd.f32 0.0, %v442
        %v444 = vpop.f32.mrb[0].mxu0
        %v445 = vadd.f32 0.0, %v444
        %446 = vdwg.mxu0
        %v447 = vmax.f32 %v353, 0.0
        %v448 = vmax.f32 %v355, 0.0
        %v449 = vmax.f32 %v359, 0.0
        %v450 = vmax.f32 %v361, 0.0
        %v451 = vmax.f32 %v365, 0.0
        %v452 = vmax.f32 %v367, 0.0
        %v453 = vmax.f32 %v371, 0.0
        %v454 = vmax.f32 %v373, 0.0
        %v455 = vmax.f32 %v377, 0.0
        %v456 = vmax.f32 %v379, 0.0
        %v457 = vmax.f32 %v383, 0.0
        %v458 = vmax.f32 %v385, 0.0
        %v459 = vmax.f32 %v389, 0.0
        %v460 = vmax.f32 %v391, 0.0
        %v461 = vmax.f32 %v395, 0.0
        %v462 = vmax.f32 %v397, 0.0
        %v463 = vmax.f32 %v401, 0.0
        %v464 = vmax.f32 %v403, 0.0
        %v465 = vmax.f32 %v407, 0.0
        %v466 = vmax.f32 %v409, 0.0
        %v467 = vmax.f32 %v413, 0.0
        %v468 = vmax.f32 %v415, 0.0
        %v469 = vmax.f32 %v419, 0.0
        %v470 = vmax.f32 %v421, 0.0
        %v471 = vmax.f32 %v425, 0.0
        %v472 = vmax.f32 %v427, 0.0
        %v473 = vmax.f32 %v431, 0.0
        %v474 = vmax.f32 %v433, 0.0
        %v475 = vmax.f32 %v437, 0.0
        %v476 = vmax.f32 %v439, 0.0
        %v477 = vmax.f32 %v443, 0.0
        %v478 = vmax.f32 %v445, 0.0
        %479 = vst [vmem:[#allocation2] sm:$0xff] %v447
        %480 = vst [vmem:[#allocation2 + $0x8] sm:$0xff] %v448
        %481 = vst [vmem:[#allocation2 + $0x10] sm:$0xff] %v449
        %482 = vst [vmem:[#allocation2 + $0x18] sm:$0xff] %v450
        %483 = vst [vmem:[#allocation2 + $0x20] sm:$0xff] %v451
        %484 = vst [vmem:[#allocation2 + $0x28] sm:$0xff] %v452
        %485 = vst [vmem:[#allocation2 + $0x30] sm:$0xff] %v453
        %486 = vst [vmem:[#allocation2 + $0x38] sm:$0xff] %v454
        %487 = vst [vmem:[#allocation2 + $0x40] sm:$0xff] %v455
        %488 = vst [vmem:[#allocation2 + $0x48] sm:$0xff] %v456
        %489 = vst [vmem:[#allocation2 + $0x50] sm:$0xff] %v457
        %490 = vst [vmem:[#allocation2 + $0x58] sm:$0xff] %v458
        %491 = vst [vmem:[#allocation2 + $0x60] sm:$0xff] %v459
        %492 = vst [vmem:[#allocation2 + $0x68] sm:$0xff] %v460
        %493 = vst [vmem:[#allocation2 + $0x70] sm:$0xff] %v461
        %494 = vst [vmem:[#allocation2 + $0x78] sm:$0xff] %v462
        %495 = vst [vmem:[#allocation2 + $0x80] sm:$0xff] %v463
        %496 = vst [vmem:[#allocation2 + $0x88] sm:$0xff] %v464
        %497 = vst [vmem:[#allocation2 + $0x90] sm:$0xff] %v465
        %498 = vst [vmem:[#allocation2 + $0x98] sm:$0xff] %v466
        %499 = vst [vmem:[#allocation2 + $0xa0] sm:$0xff] %v467
        %500 = vst [vmem:[#allocation2 + $0xa8] sm:$0xff] %v468
        %501 = vst [vmem:[#allocation2 + $0xb0] sm:$0xff] %v469
        %502 = vst [vmem:[#allocation2 + $0xb8] sm:$0xff] %v470
        %503 = vst [vmem:[#allocation2 + $0xc0] sm:$0xff] %v471
        %504 = vst [vmem:[#allocation2 + $0xc8] sm:$0xff] %v472
        %505 = vst [vmem:[#allocation2 + $0xd0] sm:$0xff] %v473
        %506 = vst [vmem:[#allocation2 + $0xd8] sm:$0xff] %v474
        %507 = vst [vmem:[#allocation2 + $0xe0] sm:$0xff] %v475
        %508 = vst [vmem:[#allocation2 + $0xe8] sm:$0xff] %v476
        %509 = vst [vmem:[#allocation2 + $0xf0] sm:$0xff] %v477
        %510 = vst [vmem:[#allocation2 + $0xf8] sm:$0xff] %v478
        %v511 = vld [vmem:[#allocation8] sm:$0xff]
        %v512 = vld [vmem:[#allocation8 + $0x8] sm:$0xff]
        %v513 = vld [vmem:[#allocation8 + $0x10] sm:$0xff]
        %v514 = vld [vmem:[#allocation8 + $0x18] sm:$0xff]
        %v515 = vld [vmem:[#allocation8 + $0x20] sm:$0xff]
        %v516 = vld [vmem:[#allocation8 + $0x28] sm:$0xff]
        %v517 = vld [vmem:[#allocation8 + $0x30] sm:$0xff]
        %v518 = vld [vmem:[#allocation8 + $0x38] sm:$0xff]
        %v519 = vld [vmem:[#allocation8 + $0x40] sm:$0xff]
        %v520 = vld [vmem:[#allocation8 + $0x48] sm:$0xff]
        %v521 = vld [vmem:[#allocation8 + $0x50] sm:$0xff]
        %v522 = vld [vmem:[#allocation8 + $0x58] sm:$0xff]
        %v523 = vld [vmem:[#allocation8 + $0x60] sm:$0xff]
        %v524 = vld [vmem:[#allocation8 + $0x68] sm:$0xff]
        %v525 = vld [vmem:[#allocation8 + $0x70] sm:$0xff]
        %v526 = vld [vmem:[#allocation8 + $0x78] sm:$0xff]
        %v527 = vld [vmem:[#allocation2] sm:$0xff]
        %v528 = vld [vmem:[#allocation2 + $0x8] sm:$0xff]
        %v529 = vld [vmem:[#allocation2 + $0x10] sm:$0xff]
        %v530 = vld [vmem:[#allocation2 + $0x18] sm:$0xff]
        %v531 = vld [vmem:[#allocation2 + $0x20] sm:$0xff]
        %v532 = vld [vmem:[#allocation2 + $0x28] sm:$0xff]
        %v533 = vld [vmem:[#allocation2 + $0x30] sm:$0xff]
        %v534 = vld [vmem:[#allocation2 + $0x38] sm:$0xff]
        %v535 = vld [vmem:[#allocation2 + $0x40] sm:$0xff]
        %v536 = vld [vmem:[#allocation2 + $0x48] sm:$0xff]
        %v537 = vld [vmem:[#allocation2 + $0x50] sm:$0xff]
        %v538 = vld [vmem:[#allocation2 + $0x58] sm:$0xff]
        %v539 = vld [vmem:[#allocation2 + $0x60] sm:$0xff]
        %v540 = vld [vmem:[#allocation2 + $0x68] sm:$0xff]
        %v541 = vld [vmem:[#allocation2 + $0x70] sm:$0xff]
        %v542 = vld [vmem:[#allocation2 + $0x78] sm:$0xff]
        %v543 = vld [vmem:[#allocation2 + $0x80] sm:$0xff]
        %v544 = vld [vmem:[#allocation2 + $0x88] sm:$0xff]
        %v545 = vld [vmem:[#allocation2 + $0x90] sm:$0xff]
        %v546 = vld [vmem:[#allocation2 + $0x98] sm:$0xff]
        %v547 = vld [vmem:[#allocation2 + $0xa0] sm:$0xff]
        %v548 = vld [vmem:[#allocation2 + $0xa8] sm:$0xff]
        %v549 = vld [vmem:[#allocation2 + $0xb0] sm:$0xff]
        %v550 = vld [vmem:[#allocation2 + $0xb8] sm:$0xff]
        %v551 = vld [vmem:[#allocation2 + $0xc0] sm:$0xff]
        %v552 = vld [vmem:[#allocation2 + $0xc8] sm:$0xff]
        %v553 = vld [vmem:[#allocation2 + $0xd0] sm:$0xff]
        %v554 = vld [vmem:[#allocation2 + $0xd8] sm:$0xff]
        %v555 = vld [vmem:[#allocation2 + $0xe0] sm:$0xff]
        %v556 = vld [vmem:[#allocation2 + $0xe8] sm:$0xff]
        %v557 = vld [vmem:[#allocation2 + $0xf0] sm:$0xff]
        %v558 = vld [vmem:[#allocation2 + $0xf8] sm:$0xff]
        %559 = vmatprep.subr.mxu0 %v528
        %560 = vmatpush1.msra.mxu0 %v527
        %561 = vmatprep.subr.mxu0 %v530
        %562 = vmatpush1.msra.mxu0 %v529
        %563 = vmatprep.subr.mxu0 %v532
        %564 = vmatpush1.msra.mxu0 %v531
        %565 = vmatprep.subr.mxu0 %v534
        %566 = vmatpush1.msra.mxu0 %v533
        %567 = vmatprep.subr.mxu0 %v536
        %568 = vmatpush1.msra.mxu0 %v535
        %569 = vmatprep.subr.mxu0 %v538
        %570 = vmatpush1.msra.mxu0 %v537
        %571 = vmatprep.subr.mxu0 %v540
        %572 = vmatpush1.msra.mxu0 %v539
        %573 = vmatprep.subr.mxu0 %v542
        %574 = vmatpush1.msra.mxu0 %v541
        %575 = vmatprep.subr.mxu0 %v544
        %576 = vmatpush1.msra.mxu0 %v543
        %577 = vmatprep.subr.mxu0 %v546
        %578 = vmatpush1.msra.mxu0 %v545
        %579 = vmatprep.subr.mxu0 %v548
        %580 = vmatpush1.msra.mxu0 %v547
        %581 = vmatprep.subr.mxu0 %v550
        %582 = vmatpush1.msra.mxu0 %v549
        %583 = vmatprep.subr.mxu0 %v552
        %584 = vmatpush1.msra.mxu0 %v551
        %585 = vmatprep.subr.mxu0 %v554
        %586 = vmatpush1.msra.mxu0 %v553
        %587 = vmatprep.subr.mxu0 %v556
        %588 = vmatpush1.msra.mxu0 %v555
        %589 = vmatprep.subr.mxu0 %v558
        %590 = vmatpush1.msra.mxu0 %v557
        %591 = vmatprep.subr.mxu0 0.0
        %592 = vmatpush1.msra.mxu0 0.0
        %593 = vmatprep.subr.mxu0 0.0
        %594 = vmatpush1.msra.mxu0 0.0
        %595 = vmatprep.subr.mxu0 0.0
        %596 = vmatpush1.msra.mxu0 0.0
        %597 = vmatprep.subr.mxu0 0.0
        %598 = vmatpush1.msra.mxu0 0.0
        %599 = vmatprep.subr.mxu0 0.0
        %600 = vmatpush1.msra.mxu0 0.0
        %601 = vmatprep.subr.mxu0 0.0
        %602 = vmatpush1.msra.mxu0 0.0
        %603 = vmatprep.subr.mxu0 0.0
        %604 = vmatpush1.msra.mxu0 0.0
        %605 = vmatprep.subr.mxu0 0.0
        %606 = vmatpush1.msra.mxu0 0.0
        %607 = vmatprep.subr.mxu0 0.0
        %608 = vmatpush1.msra.mxu0 0.0
        %609 = vmatprep.subr.mxu0 0.0
        %610 = vmatpush1.msra.mxu0 0.0
        %611 = vmatprep.subr.mxu0 0.0
        %612 = vmatpush1.msra.mxu0 0.0
        %613 = vmatprep.subr.mxu0 0.0
        %614 = vmatpush1.msra.mxu0 0.0
        %615 = vmatprep.subr.mxu0 0.0
        %616 = vmatpush1.msra.mxu0 0.0
        %617 = vmatprep.subr.mxu0 0.0
        %618 = vmatpush1.msra.mxu0 0.0
        %619 = vmatprep.subr.mxu0 0.0
        %620 = vmatpush1.msra.mxu0 0.0
        %621 = vmatprep.subr.mxu0 0.0
        %622 = vmatpush1.msra.mxu0 0.0
        %623 = vmatprep.mubr.f32.mxu0 0.0
        %624 = vmatmul.mubr.f32.gmra.mrb[0].mxu0 %v511
        %v625 = vpop.f32.mrb[0].mxu0
        %v626 = vadd.f32 0.0, %v625
        %v627 = vpop.f32.mrb[0].mxu0
        %v628 = vadd.f32 0.0, %v627
        %629 = vmatprep.mubr.f32.mxu0 0.0
        %630 = vmatmul.mubr.f32.gmra.mrb[0].mxu0 %v512
        %v631 = vpop.f32.mrb[0].mxu0
        %v632 = vadd.f32 0.0, %v631
        %v633 = vpop.f32.mrb[0].mxu0
        %v634 = vadd.f32 0.0, %v633
        %635 = vmatprep.mubr.f32.mxu0 0.0
        %636 = vmatmul.mubr.f32.gmra.mrb[0].mxu0 %v513
        %v637 = vpop.f32.mrb[0].mxu0
        %v638 = vadd.f32 0.0, %v637
        %v639 = vpop.f32.mrb[0].mxu0
        %v640 = vadd.f32 0.0, %v639
        %641 = vmatprep.mubr.f32.mxu0 0.0
        %642 = vmatmul.mubr.f32.gmra.mrb[0].mxu0 %v514
        %v643 = vpop.f32.mrb[0].mxu0
        %v644 = vadd.f32 0.0, %v643
        %v645 = vpop.f32.mrb[0].mxu0
        %v646 = vadd.f32 0.0, %v645
        %647 = vmatprep.mubr.f32.mxu0 0.0
        %648 = vmatmul.mubr.f32.gmra.mrb[0].mxu0 %v515
        %v649 = vpop.f32.mrb[0].mxu0
        %v650 = vadd.f32 0.0, %v649
        %v651 = vpop.f32.mrb[0].mxu0
        %v652 = vadd.f32 0.0, %v651
        %653 = vmatprep.mubr.f32.mxu0 0.0
        %654 = vmatmul.mubr.f32.gmra.mrb[0].mxu0 %v516
        %v655 = vpop.f32.mrb[0].mxu0
        %v656 = vadd.f32 0.0, %v655
        %v657 = vpop.f32.mrb[0].mxu0
        %v658 = vadd.f32 0.0, %v657
        %659 = vmatprep.mubr.f32.mxu0 0.0
        %660 = vmatmul.mubr.f32.gmra.mrb[0].mxu0 %v517
        %v661 = vpop.f32.mrb[0].mxu0
        %v662 = vadd.f32 0.0, %v661
        %v663 = vpop.f32.mrb[0].mxu0
        %v664 = vadd.f32 0.0, %v663
        %665 = vmatprep.mubr.f32.mxu0 0.0
        %666 = vmatmul.mubr.f32.gmra.mrb[0].mxu0 %v518
        %v667 = vpop.f32.mrb[0].mxu0
        %v668 = vadd.f32 0.0, %v667
        %v669 = vpop.f32.mrb[0].mxu0
        %v670 = vadd.f32 0.0, %v669
        %671 = vmatprep.mubr.f32.mxu0 0.0
        %672 = vmatmul.mubr.f32.gmra.mrb[0].mxu0 %v519
        %v673 = vpop.f32.mrb[0].mxu0
        %v674 = vadd.f32 0.0, %v673
        %v675 = vpop.f32.mrb[0].mxu0
        %v676 = vadd.f32 0.0, %v675
        %677 = vmatprep.mubr.f32.mxu0 0.0
        %678 = vmatmul.mubr.f32.gmra.mrb[0].mxu0 %v520
        %v679 = vpop.f32.mrb[0].mxu0
        %v680 = vadd.f32 0.0, %v679
        %v681 = vpop.f32.mrb[0].mxu0
        %v682 = vadd.f32 0.0, %v681
        %683 = vmatprep.mubr.f32.mxu0 0.0
        %684 = vmatmul.mubr.f32.gmra.mrb[0].mxu0 %v521
        %v685 = vpop.f32.mrb[0].mxu0
        %v686 = vadd.f32 0.0, %v685
        %v687 = vpop.f32.mrb[0].mxu0
        %v688 = vadd.f32 0.0, %v687
        %689 = vmatprep.mubr.f32.mxu0 0.0
        %690 = vmatmul.mubr.f32.gmra.mrb[0].mxu0 %v522
        %v691 = vpop.f32.mrb[0].mxu0
        %v692 = vadd.f32 0.0, %v691
        %v693 = vpop.f32.mrb[0].mxu0
        %v694 = vadd.f32 0.0, %v693
        %695 = vmatprep.mubr.f32.mxu0 0.0
        %696 = vmatmul.mubr.f32.gmra.mrb[0].mxu0 %v523
        %v697 = vpop.f32.mrb[0].mxu0
        %v698 = vadd.f32 0.0, %v697
        %v699 = vpop.f32.mrb[0].mxu0
        %v700 = vadd.f32 0.0, %v699
        %701 = vmatprep.mubr.f32.mxu0 0.0
        %702 = vmatmul.mubr.f32.gmra.mrb[0].mxu0 %v524
        %v703 = vpop.f32.mrb[0].mxu0
        %v704 = vadd.f32 0.0, %v703
        %v705 = vpop.f32.mrb[0].mxu0
        %v706 = vadd.f32 0.0, %v705
        %707 = vmatprep.mubr.f32.mxu0 0.0
        %708 = vmatmul.mubr.f32.gmra.mrb[0].mxu0 %v525
        %v709 = vpop.f32.mrb[0].mxu0
        %v710 = vadd.f32 0.0, %v709
        %v711 = vpop.f32.mrb[0].mxu0
        %v712 = vadd.f32 0.0, %v711
        %713 = vmatprep.mubr.f32.mxu0 0.0
        %714 = vmatmul.mubr.f32.gmra.mrb[0].mxu0 %v526
        %v715 = vpop.f32.mrb[0].mxu0
        %v716 = vadd.f32 0.0, %v715
        %v717 = vpop.f32.mrb[0].mxu0
        %v718 = vadd.f32 0.0, %v717
        %719 = vdwg.mxu0
        %v720 = vmax.f32 %v626, 0.0
        %v721 = vmax.f32 %v628, 0.0
        %v722 = vmax.f32 %v632, 0.0
        %v723 = vmax.f32 %v634, 0.0
        %v724 = vmax.f32 %v638, 0.0
        %v725 = vmax.f32 %v640, 0.0
        %v726 = vmax.f32 %v644, 0.0
        %v727 = vmax.f32 %v646, 0.0
        %v728 = vmax.f32 %v650, 0.0
        %v729 = vmax.f32 %v652, 0.0
        %v730 = vmax.f32 %v656, 0.0
        %v731 = vmax.f32 %v658, 0.0
        %v732 = vmax.f32 %v662, 0.0
        %v733 = vmax.f32 %v664, 0.0
        %v734 = vmax.f32 %v668, 0.0
        %v735 = vmax.f32 %v670, 0.0
        %v736 = vmax.f32 %v674, 0.0
        %v737 = vmax.f32 %v676, 0.0
        %v738 = vmax.f32 %v680, 0.0
        %v739 = vmax.f32 %v682, 0.0
        %v740 = vmax.f32 %v686, 0.0
        %v741 = vmax.f32 %v688, 0.0
        %v742 = vmax.f32 %v692, 0.0
        %v743 = vmax.f32 %v694, 0.0
        %v744 = vmax.f32 %v698, 0.0
        %v745 = vmax.f32 %v700, 0.0
        %v746 = vmax.f32 %v704, 0.0
        %v747 = vmax.f32 %v706, 0.0
        %v748 = vmax.f32 %v710, 0.0
        %v749 = vmax.f32 %v712, 0.0
        %v750 = vmax.f32 %v716, 0.0
        %v751 = vmax.f32 %v718, 0.0
        %752 = vst [vmem:[%s235] sm:$0xff] %v720
        %753 = vst [vmem:[%s235 + $0x8] sm:$0xff] %v721
        %754 = vst [vmem:[%s235 + $0x10] sm:$0xff] %v722
        %755 = vst [vmem:[%s235 + $0x18] sm:$0xff] %v723
        %756 = vst [vmem:[%s235 + $0x20] sm:$0xff] %v724
        %757 = vst [vmem:[%s235 + $0x28] sm:$0xff] %v725
        %758 = vst [vmem:[%s235 + $0x30] sm:$0xff] %v726
        %759 = vst [vmem:[%s235 + $0x38] sm:$0xff] %v727
        %760 = vst [vmem:[%s235 + $0x40] sm:$0xff] %v728
        %761 = vst [vmem:[%s235 + $0x48] sm:$0xff] %v729
        %762 = vst [vmem:[%s235 + $0x50] sm:$0xff] %v730
        %763 = vst [vmem:[%s235 + $0x58] sm:$0xff] %v731
        %764 = vst [vmem:[%s235 + $0x60] sm:$0xff] %v732
        %765 = vst [vmem:[%s235 + $0x68] sm:$0xff] %v733
        %766 = vst [vmem:[%s235 + $0x70] sm:$0xff] %v734
        %767 = vst [vmem:[%s235 + $0x78] sm:$0xff] %v735
        %768 = vst [vmem:[%s235 + $0x80] sm:$0xff] %v736
        %769 = vst [vmem:[%s235 + $0x88] sm:$0xff] %v737
        %770 = vst [vmem:[%s235 + $0x90] sm:$0xff] %v738
        %771 = vst [vmem:[%s235 + $0x98] sm:$0xff] %v739
        %772 = vst [vmem:[%s235 + $0xa0] sm:$0xff] %v740
        %773 = vst [vmem:[%s235 + $0xa8] sm:$0xff] %v741
        %774 = vst [vmem:[%s235 + $0xb0] sm:$0xff] %v742
        %775 = vst [vmem:[%s235 + $0xb8] sm:$0xff] %v743
        %776 = vst [vmem:[%s235 + $0xc0] sm:$0xff] %v744
        %777 = vst [vmem:[%s235 + $0xc8] sm:$0xff] %v745
        %778 = vst [vmem:[%s235 + $0xd0] sm:$0xff] %v746
        %779 = vst [vmem:[%s235 + $0xd8] sm:$0xff] %v747
        %780 = vst [vmem:[%s235 + $0xe0] sm:$0xff] %v748
        %781 = vst [vmem:[%s235 + $0xe8] sm:$0xff] %v749
        %782 = vst [vmem:[%s235 + $0xf0] sm:$0xff] %v750
        %783 = vst [vmem:[%s235 + $0xf8] sm:$0xff] %v751
        %s784 = sand.u32 %s113, 1
        %s785 = scalar_lea.sflag [#allocation5], %s784
        %s786 = sand.u32 %s113, 1
        %s787 = smul.addr %s786, 256
        %s788 = scalar_lea.vmem [#allocation9], %s787
        // Predicated region
        $region45: #{tpu_custom_call.1} parent=31 // pred_check
          %p789 = pneg %p123
        $region46: #{tpu_custom_call.1} parent=31 // pred_check_branch
          %791 = sbr.rel (%p789) target = $region48
        $region47: #{tpu_custom_call.1} parent=31 // pred_region
          %s792 = smul.u32 2, %s26
          %s794 = ssub.s32 4096, 4096
          %795 = vsyncadd %s785, %s794
          %s796 = smul.addr %s25, 64
          %s797 = sadd.s32 %s792, %s796
          %s798 = smul.addr %s797, 128
          %s799 = scalar_lea.hbm %s3, %s798
          %s800 = sshll.u32 %s788, 4
          %s801 = int_to_ptr.vmem [resolvable:$true] %s800
          %806 = dma.vmem_to_hbm [thread:$0]  %s801, 4096, %s799, %s785, 256, 512, 16
        $region48: #{tpu_custom_call.1} parent=31 // pred_fallthru
          _
      $region32: #{tpu_custom_call.1} parent=5 // pred_fallthru
        _
      %p807 = scmp.le.s32.totalorder 2, %s16
      // Predicated region
      $region49: #{tpu_custom_call.1} parent=5 // pred_check
        %p808 = pneg %p807
      $region50: #{tpu_custom_call.1} parent=5 // pred_check_branch
        %810 = sbr.rel (%p808) target = $region52
      $region51: #{tpu_custom_call.1} parent=5 // pred_region
        %s811 = ssub.s32 %s16, 2
        // Predicated region
        $region53: #{tpu_custom_call.1} parent=51 // pred_check
          %p812 = pneg %p129
        $region54: #{tpu_custom_call.1} parent=51 // pred_check_branch
          %814 = sbr.rel (%p812) target = $region56
        $region55: #{tpu_custom_call.1} parent=51 // pred_region
          %s815 = sand.u32 %s114, 1
          %s816 = scalar_lea.sflag [#allocation5], %s815
          %s817 = sand.u32 %s114, 1
          %s818 = smul.addr %s817, 256
          %s819 = scalar_lea.vmem [#allocation9], %s818
          %820 = dma.done %s816, 4096
        $region56: #{tpu_custom_call.1} parent=51 // pred_fallthru
          _
      $region52: #{tpu_custom_call.1} parent=5 // pred_fallthru
        _
    $region6: #{tpu_custom_call.1} parent=1 // loop_footer
      %s20 = sadd.s32 1, %s16
    $region7: #{tpu_custom_call.1} parent=1 // loop_footer_branch
      %15 = sbr.rel target = $region3
    $region8: #{tpu_custom_call.1} parent=1 // loop_exit
      _
    %821 = vsyncpa [#allocation4], 1
    %s822 = scalar_lea.sflag [#allocation4], 1
    %823 = vsyncpa %s822, 1
    %824 = vsyncpa [#allocation7], 1
    %825 = vsyncpa [#allocation5], 1
    %s826 = scalar_lea.sflag [#allocation5], 1
    %827 = vsyncpa %s826, 1

</llo_original>
